<compile_context>
chip_gen: v7x
topology: tpu7x:2x2x1
jax: 0.10.0
libtpu: 0.0.40
codegen_flags: <defaults>
</compile_context>

<pallas_src>
import functools

import jax
import jax.numpy as jnp
from jax import lax
from jax.experimental import pallas as pl
from jax.experimental.pallas import tpu as pltpu


def _round_up(x, m):
    return (x + m - 1) // m * m


def _pad_cast(a, tgt_shape, dtype):
    """Cast + zero-pad to target shape; elides all work when already aligned."""
    a = a.astype(dtype)  # no-op if dtype already matches
    if tuple(a.shape) == tuple(tgt_shape):
        return a
    pads = [(0, t - s) for s, t in zip(a.shape, tgt_shape)]
    return jnp.pad(a, pads)


def _default_vmem_limit_bytes():
    try:
        cap = int(pltpu.get_tpu_info().vmem_capacity_bytes)
    except Exception:  # interpret mode / API drift
        cap = 64 * 1024 * 1024
    # ~75% of per-core VMEM, capped at 100 MiB (v5e/v6e: 96 MiB, v7x: 48 MiB).
    return max(32 * 1024 * 1024, min(cap * 3 // 4, 100 * 1024 * 1024))


# --------------------------------------------------------------------------
# GCN layer: out_rowslab = act( (sum_k adj[i_slab, k_slab] @ x[k_slab, :]) @ W )
# grid = (B, nt_i, nt_k); k = node-dim reduction axis ("arbitrary"), f32 acc.
# --------------------------------------------------------------------------
def _gcn_kernel(x_ref, adj_ref, w_ref, out_ref, acc_ref, *, apply_relu):
    k = pl.program_id(2)

    @pl.when(k == 0)
    def _():
        acc_ref[...] = jnp.zeros_like(acc_ref)

    # (TM, TK) @ (TK, F) -> accumulate in f32 on the MXU.
    acc_ref[...] += jnp.dot(adj_ref[0], x_ref[0],
                            preferred_element_type=jnp.float32)

    @pl.when(k == pl.num_programs(2) - 1)
    def _():
        t = acc_ref[...].astype(w_ref.dtype)
        out = jnp.dot(t, w_ref[...], preferred_element_type=jnp.float32)
        if apply_relu:
            out = jnp.maximum(out, 0.0)
        out_ref[0] = out.astype(out_ref.dtype)


def _gcn_layer(x_p, adj_p, w_p, *, TM, out_dtype, apply_relu, vmem_limit,
               adj_buffers=2):
    B, N_p, Fin_p = x_p.shape
    H_p = w_p.shape[1]
    nt = N_p // TM

    adj_kwargs = {}
    if adj_buffers != 2:  # deeper pipelining of the dominant (adj) DMA stream
        adj_kwargs["pipeline_mode"] = pl.Buffered(adj_buffers)

    return pl.pallas_call(
        functools.partial(_gcn_kernel, apply_relu=apply_relu),
        out_shape=jax.ShapeDtypeStruct((B, N_p, H_p), out_dtype),
        grid_spec=pltpu.PrefetchScalarGridSpec(
            num_scalar_prefetch=0,
            grid=(B, nt, nt),
            in_specs=[
                pl.BlockSpec((1, TM, Fin_p), lambda b, i, k: (b, k, 0)),
                pl.BlockSpec((1, TM, TM), lambda b, i, k: (b, i, k),
                             **adj_kwargs),
                pl.BlockSpec((Fin_p, H_p), lambda b, i, k: (0, 0)),
            ],
            out_specs=pl.BlockSpec((1, TM, H_p), lambda b, i, k: (b, i, 0)),
            scratch_shapes=[pltpu.VMEM((TM, Fin_p), jnp.float32)],
        ),
        compiler_params=pltpu.CompilerParams(
            dimension_semantics=("parallel", "parallel", "arbitrary"),
            vmem_limit_bytes=vmem_limit),
    )(x_p, adj_p, w_p)


# --------------------------------------------------------------------------
# Decoder: recon tile (i, j) = mu_i @ mu_j^T  (contract on feature dim -> no
# explicit transpose / XLU vxpose).  j-tile is wide (lane-dense stores).
# --------------------------------------------------------------------------
def _recon_kernel(mu_i_ref, mu_j_ref, recon_ref, *, compute_dtype):
    mi = mu_i_ref[0].astype(compute_dtype)   # (TM, D_p)
    mj = mu_j_ref[0].astype(compute_dtype)   # (TN, D_p)
    r = lax.dot_general(mi, mj,
                        dimension_numbers=(((1,), (1,)), ((), ())),
                        preferred_element_type=jnp.float32)
    recon_ref[0] = r.astype(recon_ref.dtype)


# --------------------------------------------------------------------------
# Wrapper
# --------------------------------------------------------------------------
@functools.partial(jax.jit, static_argnames=(
    "compute_dtype", "recon_dtype", "row_tile", "recon_col_tile", "adj_buffers"))
def vgae_forward(x, adj, w1, w2, w3, *,
                 compute_dtype=jnp.float32,
                 recon_dtype=jnp.bfloat16,
                 row_tile=None,
                 recon_col_tile=2048,
                 adj_buffers=2):
    """Eval-mode VGAE forward. Returns (recon, mu, logvar)."""
    B, N, Fin = x.shape
    H1 = w1.shape[1]
    D = w2.shape[1]

    # Lane-dense padding of feature dims.
    Fin_p = _round_up(Fin, 128)
    H1_p = _round_up(H1, 128)
    D_p = _round_up(D, 128)

    # Node-dim row/reduction tile (multiple of 8; multiple of 128 when tiled).
    if row_tile is None:
        TM = min(_round_up(N, 8), 512)
    else:
        TM = _round_up(row_tile, 8)
    N_p = _round_up(N, TM)
    nt = N_p // TM
    if nt > 1 and TM % 128 != 0:
        TM = _round_up(TM, 128)
        N_p = _round_up(N, TM)
        nt = N_p // TM

    # Zero-padded operands (padding contributes exact zeros everywhere).
    # adj (the largest operand) is NOT rematerialized when already aligned.
    x_p = _pad_cast(x, (B, N_p, Fin_p), compute_dtype)
    adj_p = _pad_cast(adj, (B, N_p, N_p), compute_dtype)
    w1_p = _pad_cast(w1, (Fin_p, H1_p), compute_dtype)
    # Packed [W2 | W3] at lane-aligned offsets 0 and D_p.
    w23_p = jnp.zeros((H1_p, 2 * D_p), compute_dtype)
    w23_p = w23_p.at[:H1, :D].set(w2.astype(compute_dtype))
    w23_p = w23_p.at[:H1, D_p:D_p + D].set(w3.astype(compute_dtype))

    vmem_limit = _default_vmem_limit_bytes()

    # ---- Layer 1: hidden1 = relu((adj @ x) @ W1) --------------------------
    h1 = _gcn_layer(x_p, adj_p, w1_p, TM=TM, out_dtype=compute_dtype,
                    apply_relu=True, vmem_limit=vmem_limit,
                    adj_buffers=adj_buffers)

    # ---- Layer 2+3 fused: [mu | logvar] = (adj @ hidden1) @ [W2|W3] ------
    ml = _gcn_layer(h1, adj_p, w23_p, TM=TM, out_dtype=compute_dtype,
                    apply_relu=False, vmem_limit=vmem_limit,
                    adj_buffers=adj_buffers)

    # ---- Decoder: recon = mu @ mu^T, grid (B, nt_i, nt_j) with wide j-tile.
    # mu is sliced straight out of the packed [mu|logvar] tensor by BlockSpec.
    nt_col = 1
    for g in range(1, nt + 1):
        if nt % g == 0 and g * TM <= recon_col_tile:
            nt_col = g
    TN = nt_col * TM

    recon_p = pl.pallas_call(
        functools.partial(_recon_kernel, compute_dtype=compute_dtype),
        out_shape=jax.ShapeDtypeStruct((B, N_p, N_p), recon_dtype),
        grid_spec=pltpu.PrefetchScalarGridSpec(
            num_scalar_prefetch=0,
            grid=(B, nt, N_p // TN),
            in_specs=[
                pl.BlockSpec((1, TM, D_p), lambda b, i, j: (b, i, 0)),
                pl.BlockSpec((1, TN, D_p), lambda b, i, j: (b, j, 0)),
            ],
            out_specs=pl.BlockSpec((1, TM, TN), lambda b, i, j: (b, i, j)),
        ),
        compiler_params=pltpu.CompilerParams(
            dimension_semantics=("parallel", "parallel", "parallel"),
            vmem_limit_bytes=vmem_limit),
    )(ml, ml)

    # Unpack / strip padding.
    mu = ml[:, :N, :D]
    logvar = ml[:, :N, D_p:D_p + D]
    recon = recon_p[:, :N, :N]
    return recon, mu, logvar


# --------------------------------------------------------------------------
# Helpers / reference
# --------------------------------------------------------------------------
def xavier_uniform(key, fan_in, fan_out):
    # matches torch.nn.init.xavier_uniform_ on a (fan_out, fan_in) Linear weight;
    # stored transposed as (fan_in, fan_out) so that support = x @ W.
    bound = (6.0 / (fan_in + fan_out)) ** 0.5
    return jax.random.uniform(key, (fan_in, fan_out), jnp.float32, -bound, bound)


def _reference(x, adj, w1, w2, w3):
    hidden1 = jnp.maximum(jnp.einsum("bij,bjk->bik", adj, x @ w1), 0.0)
    mu = jnp.einsum("bij,bjk->bik", adj, hidden1 @ w2)
    logvar = jnp.einsum("bij,bjk->bik", adj, hidden1 @ w3)
    recon = jnp.einsum("bik,bjk->bij", mu, mu)
    return recon, mu, logvar


def _make_inputs(key, B, N, Fin, H1, D):
    kx, kadj, k1, k2, k3 = jax.random.split(key, 5)
    x = jax.random.normal(kx, (B, N, Fin), jnp.float32)
    a = jax.random.uniform(kadj, (B, N, N), jnp.float32)
    adj = (a + jnp.transpose(a, (0, 2, 1))) / (2.0 * N)
    w1 = xavier_uniform(k1, Fin, H1)
    w2 = xavier_uniform(k2, H1, D)
    w3 = xavier_uniform(k3, H1, D)
    return x, adj, w1, w2, w3


if __name__ == "__main__":
    key = jax.random.PRNGKey(0)
    k_small, k_big = jax.random.split(key, 2)

    # ---- small single-tile case (module-consistent shapes) ---------------
    B, N, Fin, H1, D = 2, 8, 16, 32, 16
    x, adj, w1, w2, w3 = _make_inputs(k_small, B, N, Fin, H1, D)

    recon, mu, logvar = vgae_forward(x, adj, w1, w2, w3)
    jax.block_until_ready((recon, mu, logvar))

    recon_r, mu_r, logvar_r = _reference(x, adj, w1, w2, w3)
    assert recon.shape == (B, N, N) and mu.shape == (B, N, D) and logvar.shape == (B, N, D)
    # recon is bf16 by default (HBM-write-bound decoder); mu/logvar are f32.
    assert jnp.allclose(recon.astype(jnp.float32), recon_r, atol=1e-4, rtol=1e-2)
    assert jnp.allclose(mu, mu_r, atol=1e-4, rtol=1e-4)
    assert jnp.allclose(logvar, logvar_r, atol=1e-4, rtol=1e-4)

    # ---- multi-tile case: exercises the k-reduction accumulator, padding,
    # and the wide recon column tile (row_tile=128 -> N_p=384, nt=3).
    B2, N2 = 2, 272
    x2, adj2, w12, w22, w32 = _make_inputs(k_big, B2, N2, Fin, H1, D)
    recon2, mu2, logvar2 = vgae_forward(x2, adj2, w12, w22, w32, row_tile=128)
    jax.block_until_ready((recon2, mu2, logvar2))
    recon2_r, mu2_r, logvar2_r = _reference(x2, adj2, w12, w22, w32)
    assert jnp.allclose(recon2.astype(jnp.float32), recon2_r, atol=1e-4, rtol=1e-2)
    assert jnp.allclose(mu2, mu2_r, atol=1e-4, rtol=1e-4)
    assert jnp.allclose(logvar2, logvar2_r, atol=1e-4, rtol=1e-4)

    # ---- bf16 compute path (v6e/v7x MXU rate; f32 accumulation; bf16 ml) --
    recon_b, mu_b, logvar_b = vgae_forward(x, adj, w1, w2, w3,
                                           compute_dtype=jnp.bfloat16)
    jax.block_until_ready((recon_b, mu_b, logvar_b))
    assert bool(jnp.isfinite(recon_b.astype(jnp.float32)).all())
    assert jnp.allclose(recon_b.astype(jnp.float32), recon_r, atol=5e-3, rtol=5e-2)
    assert jnp.allclose(mu_b.astype(jnp.float32), mu_r, atol=5e-2, rtol=5e-2)

    print("KERNEL_OK")
</pallas_src>

<mosaic_0001>
module attributes {stable_mosaic.version = 11 : i64} {
  func.func @_gcn_kernel(%arg0: i32, %arg1: i32, %arg2: i32, %arg3: memref<1x8x128xf32, #tpu.memory_space<vmem>>, %arg4: memref<1x8x8xf32, #tpu.memory_space<vmem>>, %arg5: memref<128x256xf32, #tpu.memory_space<vmem>>, %arg6: memref<1x8x256xf32, #tpu.memory_space<vmem>>, %arg7: memref<8x128xf32, #tpu.memory_space<vmem>>) attributes {dimension_semantics = [#tpu.dimension_semantics<parallel>, #tpu.dimension_semantics<parallel>, #tpu.dimension_semantics<arbitrary>], iteration_bounds = array<i64: 2, 1, 1>, scalar_prefetch = 0 : i64, scratch_operands = 1 : i64, tpu.core_type = #tpu.core_type<tc>, window_params = [{transform_indices = @transform_0, window_bounds = array<i64: 1, 8, 128>}, {transform_indices = @transform_1, window_bounds = array<i64: 1, 8, 8>}, {pipeline_mode = #tpu.pipeline_mode<synchronous>, transform_indices = @transform_2, window_bounds = array<i64: 128, 256>}, {transform_indices = @transform_3, window_bounds = array<i64: 1, 8, 256>}]} {
    %c0_i32 = arith.constant 0 : i32
    %0 = arith.cmpi eq, %arg2, %c0_i32 : i32
    %1 = arith.extui %0 : i1 to i32
    %c0_i32_0 = arith.constant 0 : i32
    %2 = arith.cmpi ne, %1, %c0_i32_0 : i32
    scf.if %2 {
      %cst_12 = arith.constant 0.000000e+00 : f32
      %14 = vector.broadcast %cst_12 : f32 to vector<8x128xf32>
      %c0_13 = arith.constant 0 : index
      %c0_14 = arith.constant 0 : index
      %15 = vector.load %arg7[%c0_13, %c0_14] : memref<8x128xf32, #tpu.memory_space<vmem>>, vector<8x128xf32>
      tpu.vector_store %arg7[%c0_13, %c0_14], %14 {strides = array<i32>} : memref<8x128xf32, #tpu.memory_space<vmem>>, vector<8x128xf32>,
    } else {
    }
    %c0 = arith.constant 0 : index
    %c0_1 = arith.constant 0 : index
    %3 = vector.load %arg7[%c0, %c0_1] : memref<8x128xf32, #tpu.memory_space<vmem>>, vector<8x128xf32>
    %c0_2 = arith.constant 0 : index
    %c0_3 = arith.constant 0 : index
    %c0_4 = arith.constant 0 : index
    %4 = vector.load %arg4[%c0_2, %c0_3, %c0_4] : memref<1x8x8xf32, #tpu.memory_space<vmem>>, vector<1x8x8xf32>
    %5 = vector.shape_cast %4 : vector<1x8x8xf32> to vector<8x8xf32>
    %c0_5 = arith.constant 0 : index
    %c0_6 = arith.constant 0 : index
    %c0_7 = arith.constant 0 : index
    %6 = vector.load %arg3[%c0_5, %c0_6, %c0_7] : memref<1x8x128xf32, #tpu.memory_space<vmem>>, vector<1x8x128xf32>
    %7 = vector.shape_cast %6 : vector<1x8x128xf32> to vector<8x128xf32>
    %cst = arith.constant dense<0.000000e+00> : vector<8x128xf32>
    %8 = tpu.matmul %5, %7, %cst {dimension_numbers = #tpu.dot_dimension_numbers<[1], [0], [0], [1], [0, 0, 1, 1], [], []>} : vector<8x8xf32>, vector<8x128xf32>, vector<8x128xf32> -> vector<8x128xf32>
    %9 = arith.addf %3, %8 : vector<8x128xf32>
    %c0_8 = arith.constant 0 : index
    %c0_9 = arith.constant 0 : index
    %10 = vector.load %arg7[%c0_8, %c0_9] : memref<8x128xf32, #tpu.memory_space<vmem>>, vector<8x128xf32>
    tpu.vector_store %arg7[%c0_8, %c0_9], %9 {strides = array<i32>} : memref<8x128xf32, #tpu.memory_space<vmem>>, vector<8x128xf32>,
    %c0_i32_10 = arith.constant 0 : i32
    %11 = arith.cmpi eq, %arg2, %c0_i32_10 : i32
    %12 = arith.extui %11 : i1 to i32
    %c0_i32_11 = arith.constant 0 : i32
    %13 = arith.cmpi ne, %12, %c0_i32_11 : i32
    scf.if %13 {
      %c0_12 = arith.constant 0 : index
      %c0_13 = arith.constant 0 : index
      %14 = vector.load %arg7[%c0_12, %c0_13] : memref<8x128xf32, #tpu.memory_space<vmem>>, vector<8x128xf32>
      %c0_14 = arith.constant 0 : index
      %c0_15 = arith.constant 0 : index
      %15 = vector.load %arg5[%c0_14, %c0_15] : memref<128x256xf32, #tpu.memory_space<vmem>>, vector<128x256xf32>
      %cst_16 = arith.constant dense<0.000000e+00> : vector<8x256xf32>
      %16 = tpu.matmul %14, %15, %cst_16 {dimension_numbers = #tpu.dot_dimension_numbers<[1], [0], [0], [1], [0, 0, 1, 1], [], []>} : vector<8x128xf32>, vector<128x256xf32>, vector<8x256xf32> -> vector<8x256xf32>
      %c0_17 = arith.constant 0 : index
      %c0_18 = arith.constant 0 : index
      %c0_19 = arith.constant 0 : index
      %17 = vector.load %arg6[%c0_17, %c0_18, %c0_19] : memref<1x8x256xf32, #tpu.memory_space<vmem>>, vector<1x8x256xf32>
      %18 = vector.shape_cast %17 : vector<1x8x256xf32> to vector<8x256xf32>
      %19 = vector.shape_cast %16 : vector<8x256xf32> to vector<1x8x256xf32>
      tpu.vector_store %arg6[%c0_17, %c0_18, %c0_19], %19 {strides = array<i32>} : memref<1x8x256xf32, #tpu.memory_space<vmem>>, vector<1x8x256xf32>,
    } else {
    }
    return
  }
  func.func @transform_0(%arg0: i32, %arg1: i32, %arg2: i32) -> (i32, i32, i32) {
    %c0_i32 = arith.constant 0 : i32
    %c0_i32_0 = arith.constant 0 : i32
    return %arg0, %arg2, %c0_i32 : i32, i32, i32
  }
  func.func @transform_1(%arg0: i32, %arg1: i32, %arg2: i32) -> (i32, i32, i32) {
    %c0_i32 = arith.constant 0 : i32
    return %arg0, %arg1, %arg2 : i32, i32, i32
  }
  func.func @transform_2(%arg0: i32, %arg1: i32, %arg2: i32) -> (i32, i32) {
    %c0_i32 = arith.constant 0 : i32
    %c0_i32_0 = arith.constant 0 : i32
    %c0_i32_1 = arith.constant 0 : i32
    return %c0_i32, %c0_i32_0 : i32, i32
  }
  func.func @transform_3(%arg0: i32, %arg1: i32, %arg2: i32) -> (i32, i32, i32) {
    %c0_i32 = arith.constant 0 : i32
    %c0_i32_0 = arith.constant 0 : i32
    return %arg0, %arg1, %c0_i32 : i32, i32, i32
  }
}

module attributes {stable_mosaic.version = 11 : i64} {
  func.func @_recon_kernel(%arg0: i32, %arg1: i32, %arg2: i32, %arg3: memref<1x8x128xf32, #tpu.memory_space<vmem>>, %arg4: memref<1x8x128xf32, #tpu.memory_space<vmem>>, %arg5: memref<1x8x8xbf16, #tpu.memory_space<vmem>>) attributes {dimension_semantics = [#tpu.dimension_semantics<parallel>, #tpu.dimension_semantics<parallel>, #tpu.dimension_semantics<parallel>], iteration_bounds = array<i64: 2, 1, 1>, scalar_prefetch = 0 : i64, scratch_operands = 0 : i64, tpu.core_type = #tpu.core_type<tc>, window_params = [{transform_indices = @transform_0, window_bounds = array<i64: 1, 8, 128>}, {transform_indices = @transform_1, window_bounds = array<i64: 1, 8, 128>}, {transform_indices = @transform_2, window_bounds = array<i64: 1, 8, 8>}]} {
    %c0 = arith.constant 0 : index
    %c0_0 = arith.constant 0 : index
    %c0_1 = arith.constant 0 : index
    %0 = vector.load %arg3[%c0, %c0_0, %c0_1] : memref<1x8x128xf32, #tpu.memory_space<vmem>>, vector<1x8x128xf32>
    %1 = vector.shape_cast %0 : vector<1x8x128xf32> to vector<8x128xf32>
    %c0_2 = arith.constant 0 : index
    %c0_3 = arith.constant 0 : index
    %c0_4 = arith.constant 0 : index
    %2 = vector.load %arg4[%c0_2, %c0_3, %c0_4] : memref<1x8x128xf32, #tpu.memory_space<vmem>>, vector<1x8x128xf32>
    %3 = vector.shape_cast %2 : vector<1x8x128xf32> to vector<8x128xf32>
    %cst = arith.constant dense<0.000000e+00> : vector<8x8xf32>
    %4 = tpu.matmul %1, %3, %cst {dimension_numbers = #tpu.dot_dimension_numbers<[1], [1], [0], [0], [0, 0, 1, 0], [], []>} : vector<8x128xf32>, vector<8x128xf32>, vector<8x8xf32> -> vector<8x8xf32>
    %5 = arith.truncf %4 : vector<8x8xf32> to vector<8x8xbf16>
    %c0_5 = arith.constant 0 : index
    %c0_6 = arith.constant 0 : index
    %c0_7 = arith.constant 0 : index
    %6 = vector.load %arg5[%c0_5, %c0_6, %c0_7] : memref<1x8x8xbf16, #tpu.memory_space<vmem>>, vector<1x8x8xbf16>
    %7 = vector.shape_cast %6 : vector<1x8x8xbf16> to vector<8x8xbf16>
    %8 = vector.shape_cast %5 : vector<8x8xbf16> to vector<1x8x8xbf16>
    tpu.vector_store %arg5[%c0_5, %c0_6, %c0_7], %8 {strides = array<i32>} : memref<1x8x8xbf16, #tpu.memory_space<vmem>>, vector<1x8x8xbf16>,
    return
  }
  func.func @transform_0(%arg0: i32, %arg1: i32, %arg2: i32) -> (i32, i32, i32) {
    %c0_i32 = arith.constant 0 : i32
    %c0_i32_0 = arith.constant 0 : i32
    return %arg0, %arg1, %c0_i32 : i32, i32, i32
  }
  func.func @transform_1(%arg0: i32, %arg1: i32, %arg2: i32) -> (i32, i32, i32) {
    %c0_i32 = arith.constant 0 : i32
    %c0_i32_0 = arith.constant 0 : i32
    return %arg0, %arg2, %c0_i32 : i32, i32, i32
  }
  func.func @transform_2(%arg0: i32, %arg1: i32, %arg2: i32) -> (i32, i32, i32) {
    %c0_i32 = arith.constant 0 : i32
    return %arg0, %arg1, %arg2 : i32, i32, i32
  }
}

module attributes {stable_mosaic.version = 11 : i64} {
  func.func @_gcn_kernel(%arg0: i32, %arg1: i32, %arg2: i32, %arg3: memref<1x8x128xf32, #tpu.memory_space<vmem>>, %arg4: memref<1x8x8xf32, #tpu.memory_space<vmem>>, %arg5: memref<128x128xf32, #tpu.memory_space<vmem>>, %arg6: memref<1x8x128xf32, #tpu.memory_space<vmem>>, %arg7: memref<8x128xf32, #tpu.memory_space<vmem>>) attributes {dimension_semantics = [#tpu.dimension_semantics<parallel>, #tpu.dimension_semantics<parallel>, #tpu.dimension_semantics<arbitrary>], iteration_bounds = array<i64: 2, 1, 1>, scalar_prefetch = 0 : i64, scratch_operands = 1 : i64, tpu.core_type = #tpu.core_type<tc>, window_params = [{transform_indices = @transform_0, window_bounds = array<i64: 1, 8, 128>}, {transform_indices = @transform_1, window_bounds = array<i64: 1, 8, 8>}, {pipeline_mode = #tpu.pipeline_mode<synchronous>, transform_indices = @transform_2, window_bounds = array<i64: 128, 128>}, {transform_indices = @transform_3, window_bounds = array<i64: 1, 8, 128>}]} {
    %c0_i32 = arith.constant 0 : i32
    %0 = arith.cmpi eq, %arg2, %c0_i32 : i32
    %1 = arith.extui %0 : i1 to i32
    %c0_i32_0 = arith.constant 0 : i32
    %2 = arith.cmpi ne, %1, %c0_i32_0 : i32
    scf.if %2 {
      %cst_12 = arith.constant 0.000000e+00 : f32
      %14 = vector.broadcast %cst_12 : f32 to vector<8x128xf32>
      %c0_13 = arith.constant 0 : index
      %c0_14 = arith.constant 0 : index
      %15 = vector.load %arg7[%c0_13, %c0_14] : memref<8x128xf32, #tpu.memory_space<vmem>>, vector<8x128xf32>
      tpu.vector_store %arg7[%c0_13, %c0_14], %14 {strides = array<i32>} : memref<8x128xf32, #tpu.memory_space<vmem>>, vector<8x128xf32>,
    } else {
    }
    %c0 = arith.constant 0 : index
    %c0_1 = arith.constant 0 : index
    %3 = vector.load %arg7[%c0, %c0_1] : memref<8x128xf32, #tpu.memory_space<vmem>>, vector<8x128xf32>
    %c0_2 = arith.constant 0 : index
    %c0_3 = arith.constant 0 : index
    %c0_4 = arith.constant 0 : index
    %4 = vector.load %arg4[%c0_2, %c0_3, %c0_4] : memref<1x8x8xf32, #tpu.memory_space<vmem>>, vector<1x8x8xf32>
    %5 = vector.shape_cast %4 : vector<1x8x8xf32> to vector<8x8xf32>
    %c0_5 = arith.constant 0 : index
    %c0_6 = arith.constant 0 : index
    %c0_7 = arith.constant 0 : index
    %6 = vector.load %arg3[%c0_5, %c0_6, %c0_7] : memref<1x8x128xf32, #tpu.memory_space<vmem>>, vector<1x8x128xf32>
    %7 = vector.shape_cast %6 : vector<1x8x128xf32> to vector<8x128xf32>
    %cst = arith.constant dense<0.000000e+00> : vector<8x128xf32>
    %8 = tpu.matmul %5, %7, %cst {dimension_numbers = #tpu.dot_dimension_numbers<[1], [0], [0], [1], [0, 0, 1, 1], [], []>} : vector<8x8xf32>, vector<8x128xf32>, vector<8x128xf32> -> vector<8x128xf32>
    %9 = arith.addf %3, %8 : vector<8x128xf32>
    %c0_8 = arith.constant 0 : index
    %c0_9 = arith.constant 0 : index
    %10 = vector.load %arg7[%c0_8, %c0_9] : memref<8x128xf32, #tpu.memory_space<vmem>>, vector<8x128xf32>
    tpu.vector_store %arg7[%c0_8, %c0_9], %9 {strides = array<i32>} : memref<8x128xf32, #tpu.memory_space<vmem>>, vector<8x128xf32>,
    %c0_i32_10 = arith.constant 0 : i32
    %11 = arith.cmpi eq, %arg2, %c0_i32_10 : i32
    %12 = arith.extui %11 : i1 to i32
    %c0_i32_11 = arith.constant 0 : i32
    %13 = arith.cmpi ne, %12, %c0_i32_11 : i32
    scf.if %13 {
      %c0_12 = arith.constant 0 : index
      %c0_13 = arith.constant 0 : index
      %14 = vector.load %arg7[%c0_12, %c0_13] : memref<8x128xf32, #tpu.memory_space<vmem>>, vector<8x128xf32>
      %c0_14 = arith.constant 0 : index
      %c0_15 = arith.constant 0 : index
      %15 = vector.load %arg5[%c0_14, %c0_15] : memref<128x128xf32, #tpu.memory_space<vmem>>, vector<128x128xf32>
      %cst_16 = arith.constant dense<0.000000e+00> : vector<8x128xf32>
      %16 = tpu.matmul %14, %15, %cst_16 {dimension_numbers = #tpu.dot_dimension_numbers<[1], [0], [0], [1], [0, 0, 1, 1], [], []>} : vector<8x128xf32>, vector<128x128xf32>, vector<8x128xf32> -> vector<8x128xf32>
      %cst_17 = arith.constant 0.000000e+00 : f32
      %17 = vector.broadcast %cst_17 : f32 to vector<8x128xf32>
      %18 = arith.maximumf %16, %17 : vector<8x128xf32>
      %c0_18 = arith.constant 0 : index
      %c0_19 = arith.constant 0 : index
      %c0_20 = arith.constant 0 : index
      %19 = vector.load %arg6[%c0_18, %c0_19, %c0_20] : memref<1x8x128xf32, #tpu.memory_space<vmem>>, vector<1x8x128xf32>
      %20 = vector.shape_cast %19 : vector<1x8x128xf32> to vector<8x128xf32>
      %21 = vector.shape_cast %18 : vector<8x128xf32> to vector<1x8x128xf32>
      tpu.vector_store %arg6[%c0_18, %c0_19, %c0_20], %21 {strides = array<i32>} : memref<1x8x128xf32, #tpu.memory_space<vmem>>, vector<1x8x128xf32>,
    } else {
    }
    return
  }
  func.func @transform_0(%arg0: i32, %arg1: i32, %arg2: i32) -> (i32, i32, i32) {
    %c0_i32 = arith.constant 0 : i32
    %c0_i32_0 = arith.constant 0 : i32
    return %arg0, %arg2, %c0_i32 : i32, i32, i32
  }
  func.func @transform_1(%arg0: i32, %arg1: i32, %arg2: i32) -> (i32, i32, i32) {
    %c0_i32 = arith.constant 0 : i32
    return %arg0, %arg1, %arg2 : i32, i32, i32
  }
  func.func @transform_2(%arg0: i32, %arg1: i32, %arg2: i32) -> (i32, i32) {
    %c0_i32 = arith.constant 0 : i32
    %c0_i32_0 = arith.constant 0 : i32
    %c0_i32_1 = arith.constant 0 : i32
    return %c0_i32, %c0_i32_0 : i32, i32
  }
  func.func @transform_3(%arg0: i32, %arg1: i32, %arg2: i32) -> (i32, i32, i32) {
    %c0_i32 = arith.constant 0 : i32
    %c0_i32_0 = arith.constant 0 : i32
    return %arg0, %arg1, %c0_i32 : i32, i32, i32
  }
}

</mosaic_0001>

<llo_original>
// kernel: vgae_forward.3
$region0: #{vgae_forward.3}
  #allocation0 [shape = 'u32[]', space=smem, size = 0x4, offset = 0x4, fixed_abs, tag = 'smem constant byte address 0x4 - core index']
  #allocation1 [shape = 'u32[144,128]{1,0:T(1,128)}', space=vmem, size = 0x12000, scoped, tag = 'internal scratch']
  #allocation2 [shape = 'f32[8,128]{1,0:T(8,128)}', space=vmem, size = 0x1000, scoped, tag = 'scratch operand']
  %s0 = inlined_call_operand.vmem [shape: f32[2,8,128], index: 0, kind: input, shape index: {}]
  %s1 = inlined_call_operand.vmem [shape: f32[2,8,8], index: 1, kind: input, shape index: {}]
  %s2 = inlined_call_operand.vmem [shape: f32[128,128], index: 2, kind: input, shape index: {}]
  %s3 = inlined_call_operand.vmem [shape: f32[2,8,128], index: 3, kind: output, shape index: {}]
  %s4 = sld [smem:[#allocation0]]
  $region53: #{vgae_forward.3} parent=0
    _
  %s6 = ssub.s32 1, %s4
  %s7 = scalar_select 0, %s6, %s4
  loop: start=0, step=1, limit=4
  $region2: #{vgae_forward.3} parent=0 // loop_pre_header
    _
  $region3: #{vgae_forward.3} parent=0 // loop_header
    %s9 = sphi 0, %s13
    %p10 = scmp.ge.s32.totalorder %s9, 4
    %s16 = sphi 0, %s35
    %s17 = sphi 0, %s31
    %s18 = sphi 0, %s27
    %s19 = sphi 0, %s16
    %s20 = sphi 0, %s17
    %s21 = sphi 0, %s18
    %s22 = sphi 0, %s19
    %s23 = sphi 0, %s20
    %s24 = sphi 0, %s21
    %s40 = sphi 0, %s42
    %s43 = sphi 0, %s40
    %s44 = sphi 0, %s43
    %s60 = sphi 0, %s44
    %s70 = sphi 0, %s72
    %s73 = sphi 0, %s70
    %s74 = sphi 0, %s73
    %s90 = sphi 0, %s74
    %s94 = sphi 0, %s94
    %s96 = sphi 0, %s94
    %s97 = sphi 0, %s96
    %s111 = sphi 0, %s97
    %s119 = sphi 0, %s121
    %s122 = sphi 0, %s119
    %s123 = sphi 0, %s122
    %s139 = sphi 0, %s123
  $region4: #{vgae_forward.3} parent=0 // loop_header_branch
    %12 = sbr.rel (%p10) target = $region8
  $region5: #{vgae_forward.3} parent=0 // loop_body
    %s14 = ssub.s32 %s9, 1
    %s15 = ssub.s32 %s9, 2
    %s25 = sadd.s32 1, %s18
    %p26 = scmp.ge.s32.totalorder %s25, 1
    %s27 = scalar_select %p26, 0, %s25
    %s28 = sadd.s32 1, %s17
    %s29 = scalar_select %p26, %s28, %s17
    %p30 = scmp.ge.s32.totalorder %s29, 1
    %s31 = scalar_select %p30, 0, %s29
    %s32 = sadd.s32 1, %s16
    %s33 = scalar_select %p30, %s32, %s16
    %p34 = scmp.ge.s32.totalorder %s33, 2
    %s35 = scalar_select %p34, 0, %s33
    %s36 = ssub.s32 %s16, %s35
    %s37 = ssub.s32 %s18, %s27
    %s38 = sor.u32 %s36, %s37
    %p39 = scmp.eq.s32.totalorder %s38, 0
    %s41 = sadd.s32 %s40, 1
    %s42 = scalar_select %p39, %s40, %s41
    %p45 = pneg %p39
    %p46 = scmp.eq.s32.totalorder %s9, 1
    %p47 = por %p45, %p46
    %p48 = scmp.ne.s32.totalorder %s40, %s43
    %p49 = scmp.eq.s32.totalorder %s9, 0
    %p50 = por %p48, %p49
    %p51 = scmp.ne.s32.totalorder %s40, %s43
    %p52 = scmp.eq.s32.totalorder %s14, 1
    %p53 = por %p51, %p52
    %p54 = scmp.ne.s32.totalorder %s43, %s44
    %p55 = scmp.eq.s32.totalorder %s14, 0
    %p56 = por %p54, %p55
    %p57 = scmp.ne.s32.totalorder %s43, %s44
    %p58 = scmp.eq.s32.totalorder %s15, 1
    %p59 = por %p57, %p58
    %p61 = scmp.ne.s32.totalorder %s44, %s60
    %p62 = scmp.eq.s32.totalorder %s15, 0
    %p63 = por %p61, %p62
    %s64 = ssub.s32 %s16, %s35
    %s65 = ssub.s32 %s17, %s31
    %s66 = sor.u32 %s64, %s65
    %s67 = ssub.s32 %s18, %s27
    %s68 = sor.u32 %s66, %s67
    %p69 = scmp.eq.s32.totalorder %s68, 0
    %s71 = sadd.s32 %s70, 1
    %s72 = scalar_select %p69, %s70, %s71
    %p75 = pneg %p69
    %p76 = scmp.eq.s32.totalorder %s9, 1
    %p77 = por %p75, %p76
    %p78 = scmp.ne.s32.totalorder %s70, %s73
    %p79 = scmp.eq.s32.totalorder %s9, 0
    %p80 = por %p78, %p79
    %p81 = scmp.ne.s32.totalorder %s70, %s73
    %p82 = scmp.eq.s32.totalorder %s14, 1
    %p83 = por %p81, %p82
    %p84 = scmp.ne.s32.totalorder %s73, %s74
    %p85 = scmp.eq.s32.totalorder %s14, 0
    %p86 = por %p84, %p85
    %p87 = scmp.ne.s32.totalorder %s73, %s74
    %p88 = scmp.eq.s32.totalorder %s15, 1
    %p89 = por %p87, %p88
    %p91 = scmp.ne.s32.totalorder %s74, %s90
    %p92 = scmp.eq.s32.totalorder %s15, 0
    %p93 = por %p91, %p92
    %s95 = sadd.s32 %s94, 1
    %p98 = scmp.eq.s32.totalorder %s9, 1
    %p99 = scmp.ne.s32.totalorder %s94, %s96
    %p100 = scmp.eq.s32.totalorder %s9, 0
    %p101 = por %p99, %p100
    %p102 = scmp.ne.s32.totalorder %s94, %s96
    %p103 = scmp.eq.s32.totalorder %s14, 1
    %p104 = por %p102, %p103
    %p105 = scmp.ne.s32.totalorder %s96, %s97
    %p106 = scmp.eq.s32.totalorder %s14, 0
    %p107 = por %p105, %p106
    %p108 = scmp.ne.s32.totalorder %s96, %s97
    %p109 = scmp.eq.s32.totalorder %s15, 1
    %p110 = por %p108, %p109
    %p112 = scmp.ne.s32.totalorder %s97, %s111
    %p113 = scmp.eq.s32.totalorder %s15, 0
    %p114 = por %p112, %p113
    %s115 = ssub.s32 %s16, %s35
    %s116 = ssub.s32 %s17, %s31
    %s117 = sor.u32 %s115, %s116
    %p118 = scmp.eq.s32.totalorder %s117, 0
    %s120 = sadd.s32 %s119, 1
    %s121 = scalar_select %p118, %s119, %s120
    %p124 = pneg %p118
    %p125 = scmp.eq.s32.totalorder %s9, 1
    %p126 = por %p124, %p125
    %p127 = scmp.ne.s32.totalorder %s119, %s122
    %p128 = scmp.eq.s32.totalorder %s9, 0
    %p129 = por %p127, %p128
    %p130 = scmp.ne.s32.totalorder %s119, %s122
    %p131 = scmp.eq.s32.totalorder %s14, 1
    %p132 = por %p130, %p131
    %p133 = scmp.ne.s32.totalorder %s122, %s123
    %p134 = scmp.eq.s32.totalorder %s14, 0
    %p135 = por %p133, %p134
    %p136 = scmp.ne.s32.totalorder %s122, %s123
    %p137 = scmp.eq.s32.totalorder %s15, 1
    %p138 = por %p136, %p137
    %p140 = scmp.ne.s32.totalorder %s123, %s139
    %p141 = scmp.eq.s32.totalorder %s15, 0
    %p142 = por %p140, %p141
    %p143 = scmp.le.s32.totalorder 1, %s9
    %p144 = scmp.lt.s32.totalorder %s9, 3
    %p145 = pnand %p143, %p144
    %p146 = pneg %p145
    // Predicated region
    $region9: #{vgae_forward.3} parent=5 // pred_check
      _
    $region10: #{vgae_forward.3} parent=5 // pred_check_branch
      %148 = sbr.rel (%p145) target = $region12
    $region11: #{vgae_forward.3} parent=5 // pred_region
      %s149 = ssub.s32 %s9, 1
      // Predicated region
      $region13: #{vgae_forward.3} parent=11 // pred_check
        %p150 = pneg %p107
      $region14: #{vgae_forward.3} parent=11 // pred_check_branch
        %152 = sbr.rel (%p150) target = $region16
      $region15: #{vgae_forward.3} parent=11 // pred_region
        _
      $region16: #{vgae_forward.3} parent=11 // pred_fallthru
        _
    $region12: #{vgae_forward.3} parent=5 // pred_fallthru
      _
    %p153 = scmp.lt.s32.totalorder %s9, 2
    // Predicated region
    $region17: #{vgae_forward.3} parent=5 // pred_check
      %p154 = pneg %p153
    $region18: #{vgae_forward.3} parent=5 // pred_check_branch
      %156 = sbr.rel (%p154) target = $region20
    $region19: #{vgae_forward.3} parent=5 // pred_region
      // Predicated region
      $region21: #{vgae_forward.3} parent=19 // pred_check
        %p157 = pneg %p50
      $region22: #{vgae_forward.3} parent=19 // pred_check_branch
        %159 = sbr.rel (%p157) target = $region24
      $region23: #{vgae_forward.3} parent=19 // pred_region
        %p160 = scmp.lt.s32.totalorder %s16, 1
        %s161 = scalar_select %p160, %s16, 1
        %p162 = scmp.lt.s32.totalorder %s18, 0
        %s163 = scalar_select %p162, %s18, 0
        %s164 = sadd.s32 %s163, %s161
        %s165 = smul.addr %s164, 8
        %s166 = scalar_lea.vmem %s0, %s165
      $region24: #{vgae_forward.3} parent=19 // pred_fallthru
        _
      // Predicated region
      $region25: #{vgae_forward.3} parent=19 // pred_check
        %p167 = pneg %p80
      $region26: #{vgae_forward.3} parent=19 // pred_check_branch
        %169 = sbr.rel (%p167) target = $region28
      $region27: #{vgae_forward.3} parent=19 // pred_region
        %p170 = scmp.lt.s32.totalorder %s16, 1
        %s171 = scalar_select %p170, %s16, 1
        %p172 = scmp.lt.s32.totalorder %s17, 0
        %s173 = scalar_select %p172, %s17, 0
        %p174 = scmp.lt.s32.totalorder %s18, 0
        %s175 = scalar_select %p174, %s18, 0
        %s176 = sadd.s32 %s175, %s173
        %s177 = sadd.s32 %s176, %s171
        %s178 = smul.addr %s177, 8
        %s179 = scalar_lea.vmem %s1, %s178
      $region28: #{vgae_forward.3} parent=19 // pred_fallthru
        _
    $region20: #{vgae_forward.3} parent=5 // pred_fallthru
      _
    %p180 = scmp.le.s32.totalorder 1, %s9
    %p181 = scmp.lt.s32.totalorder %s9, 3
    %p182 = pnand %p180, %p181
    %p183 = pneg %p182
    // Predicated region
    $region29: #{vgae_forward.3} parent=5 // pred_check
      _
    $region30: #{vgae_forward.3} parent=5 // pred_check_branch
      %185 = sbr.rel (%p182) target = $region32
    $region31: #{vgae_forward.3} parent=5 // pred_region
      %s186 = ssub.s32 %s9, 1
      %p187 = scmp.lt.s32.totalorder %s19, 1
      %s188 = scalar_select %p187, %s19, 1
      %p189 = scmp.lt.s32.totalorder %s21, 0
      %s190 = scalar_select %p189, %s21, 0
      %s191 = sadd.s32 %s190, %s188
      %s192 = smul.addr %s191, 8
      %s193 = scalar_lea.vmem %s0, %s192
      %p194 = pneg %p56
      %p195 = pneg %p53
      %p196 = scmp.lt.s32.totalorder %s19, 1
      %s197 = scalar_select %p196, %s19, 1
      %p198 = scmp.lt.s32.totalorder %s20, 0
      %s199 = scalar_select %p198, %s20, 0
      %p200 = scmp.lt.s32.totalorder %s21, 0
      %s201 = scalar_select %p200, %s21, 0
      %s202 = sadd.s32 %s201, %s199
      %s203 = sadd.s32 %s202, %s197
      %s204 = smul.addr %s203, 8
      %s205 = scalar_lea.vmem %s1, %s204
      %p206 = pneg %p86
      %p207 = pneg %p83
      %p208 = pneg %p107
      %p209 = pneg %p104
      %p210 = pneg %p135
      %p211 = pneg %p132
      %p212 = scmp.lt.s32.totalorder %s19, 1
      %s213 = scalar_select %p212, %s19, 1
      %p214 = scmp.lt.s32.totalorder %s20, 0
      %s215 = scalar_select %p214, %s20, 0
      %s216 = sadd.s32 %s215, %s213
      %s217 = smul.addr %s216, 8
      %s218 = scalar_lea.vmem %s3, %s217
      %p219 = scmp.lt.s32.totalorder %s19, 1
      %s220 = scalar_select %p219, %s19, 1
      %p221 = scmp.lt.s32.totalorder %s21, 0
      %s222 = scalar_select %p221, %s21, 0
      %s223 = sadd.s32 %s222, %s220
      %s224 = smul.addr %s223, 8
      %s225 = scalar_lea.vmem %s0, %s224
      %p226 = scmp.lt.s32.totalorder %s19, 1
      %s227 = scalar_select %p226, %s19, 1
      %p228 = scmp.lt.s32.totalorder %s20, 0
      %s229 = scalar_select %p228, %s20, 0
      %p230 = scmp.lt.s32.totalorder %s21, 0
      %s231 = scalar_select %p230, %s21, 0
      %s232 = sadd.s32 %s231, %s229
      %s233 = sadd.s32 %s232, %s227
      %s234 = smul.addr %s233, 8
      %s235 = scalar_lea.vmem %s1, %s234
      %p236 = scmp.lt.s32.totalorder %s19, 1
      %s237 = scalar_select %p236, %s19, 1
      %p238 = scmp.lt.s32.totalorder %s20, 0
      %s239 = scalar_select %p238, %s20, 0
      %s240 = sadd.s32 %s239, %s237
      %s241 = smul.addr %s240, 8
      %s242 = scalar_lea.vmem %s3, %s241
      %p243 = scmp.eq.s32.totalorder %s21, 0
      // Predicated region
      $region33: #{vgae_forward.3} parent=31 // pred_check
        %p244 = pneg %p243
      $region34: #{vgae_forward.3} parent=31 // pred_check_branch
        %246 = sbr.rel (%p244) target = $region36
      $region35: #{vgae_forward.3} parent=31 // pred_region
        %247 = vst [vmem:[#allocation2] sm:$0xff] 0.0
      $region36: #{vgae_forward.3} parent=31 // pred_fallthru
        _
      %v248 = vld [vmem:[#allocation2] sm:$0xff]
      %v249 = vld [vmem:[%s235] sm:$0xff]
      %v250 = vld [vmem:[%s225] sm:$0xff]
      %vm251 = vcmask 64512
      %v253 = vsel %vm251, %v249, 0
      %255 = vmatprep.subr.mxu0 0.0
      %256 = vmatpush1.msra.mxu0 %v250
      %257 = vmatprep.subr.mxu0 0.0
      %258 = vmatpush1.msra.mxu0 0.0
      %259 = vmatprep.subr.mxu0 0.0
      %260 = vmatpush1.msra.mxu0 0.0
      %261 = vmatprep.subr.mxu0 0.0
      %262 = vmatpush1.msra.mxu0 0.0
      %263 = vmatprep.subr.mxu0 0.0
      %264 = vmatpush1.msra.mxu0 0.0
      %265 = vmatprep.subr.mxu0 0.0
      %266 = vmatpush1.msra.mxu0 0.0
      %267 = vmatprep.subr.mxu0 0.0
      %268 = vmatpush1.msra.mxu0 0.0
      %269 = vmatprep.subr.mxu0 0.0
      %270 = vmatpush1.msra.mxu0 0.0
      %271 = vmatprep.subr.mxu0 0.0
      %272 = vmatpush1.msra.mxu0 0.0
      %273 = vmatprep.subr.mxu0 0.0
      %274 = vmatpush1.msra.mxu0 0.0
      %275 = vmatprep.subr.mxu0 0.0
      %276 = vmatpush1.msra.mxu0 0.0
      %277 = vmatprep.subr.mxu0 0.0
      %278 = vmatpush1.msra.mxu0 0.0
      %279 = vmatprep.subr.mxu0 0.0
      %280 = vmatpush1.msra.mxu0 0.0
      %281 = vmatprep.subr.mxu0 0.0
      %282 = vmatpush1.msra.mxu0 0.0
      %283 = vmatprep.subr.mxu0 0.0
      %284 = vmatpush1.msra.mxu0 0.0
      %285 = vmatprep.subr.mxu0 0.0
      %286 = vmatpush1.msra.mxu0 0.0
      %287 = vmatprep.subr.mxu0 0.0
      %288 = vmatpush1.msra.mxu0 0.0
      %289 = vmatprep.subr.mxu0 0.0
      %290 = vmatpush1.msra.mxu0 0.0
      %291 = vmatprep.subr.mxu0 0.0
      %292 = vmatpush1.msra.mxu0 0.0
      %293 = vmatprep.subr.mxu0 0.0
      %294 = vmatpush1.msra.mxu0 0.0
      %295 = vmatprep.subr.mxu0 0.0
      %296 = vmatpush1.msra.mxu0 0.0
      %297 = vmatprep.subr.mxu0 0.0
      %298 = vmatpush1.msra.mxu0 0.0
      %299 = vmatprep.subr.mxu0 0.0
      %300 = vmatpush1.msra.mxu0 0.0
      %301 = vmatprep.subr.mxu0 0.0
      %302 = vmatpush1.msra.mxu0 0.0
      %303 = vmatprep.subr.mxu0 0.0
      %304 = vmatpush1.msra.mxu0 0.0
      %305 = vmatprep.subr.mxu0 0.0
      %306 = vmatpush1.msra.mxu0 0.0
      %307 = vmatprep.subr.mxu0 0.0
      %308 = vmatpush1.msra.mxu0 0.0
      %309 = vmatprep.subr.mxu0 0.0
      %310 = vmatpush1.msra.mxu0 0.0
      %311 = vmatprep.subr.mxu0 0.0
      %312 = vmatpush1.msra.mxu0 0.0
      %313 = vmatprep.subr.mxu0 0.0
      %314 = vmatpush1.msra.mxu0 0.0
      %315 = vmatprep.subr.mxu0 0.0
      %316 = vmatpush1.msra.mxu0 0.0
      %317 = vmatprep.subr.mxu0 0.0
      %318 = vmatpush1.msra.mxu0 0.0
      %319 = vmatprep.mubr.f32.mxu0 0.0
      %320 = vmatmul.mubr.f32.gmra.mrb[0].mxu0 %v253
      %v321 = vpop.f32.mrb[0].mxu0
      %v322 = vadd.f32 0.0, %v321
      %v323 = vpop.f32.mrb[0].mxu0
      %324 = vdwg.mxu0
      %v325 = vadd.f32 %v248, %v322
      %326 = vst [vmem:[#allocation2] sm:$0xff] %v325
      // Predicated region
      $region37: #{vgae_forward.3} parent=31 // pred_check
        %p327 = pneg %p243
      $region38: #{vgae_forward.3} parent=31 // pred_check_branch
        %329 = sbr.rel (%p327) target = $region40
      $region39: #{vgae_forward.3} parent=31 // pred_region
        %v330 = vld [vmem:[#allocation2] sm:$0xff]
        %v331 = vld [vmem:[%s2] sm:$0xff]
        %v332 = vld [vmem:[%s2 + $0x8] sm:$0xff]
        %v333 = vld [vmem:[%s2 + $0x10] sm:$0xff]
        %v334 = vld [vmem:[%s2 + $0x18] sm:$0xff]
        %v335 = vld [vmem:[%s2 + $0x20] sm:$0xff]
        %v336 = vld [vmem:[%s2 + $0x28] sm:$0xff]
        %v337 = vld [vmem:[%s2 + $0x30] sm:$0xff]
        %v338 = vld [vmem:[%s2 + $0x38] sm:$0xff]
        %v339 = vld [vmem:[%s2 + $0x40] sm:$0xff]
        %v340 = vld [vmem:[%s2 + $0x48] sm:$0xff]
        %v341 = vld [vmem:[%s2 + $0x50] sm:$0xff]
        %v342 = vld [vmem:[%s2 + $0x58] sm:$0xff]
        %v343 = vld [vmem:[%s2 + $0x60] sm:$0xff]
        %v344 = vld [vmem:[%s2 + $0x68] sm:$0xff]
        %v345 = vld [vmem:[%s2 + $0x70] sm:$0xff]
        %v346 = vld [vmem:[%s2 + $0x78] sm:$0xff]
        %347 = vmatprep.subr.mxu0 0.0
        %348 = vmatpush1.msra.mxu0 %v331
        %349 = vmatprep.subr.mxu0 0.0
        %350 = vmatpush1.msra.mxu0 %v332
        %351 = vmatprep.subr.mxu0 0.0
        %352 = vmatpush1.msra.mxu0 %v333
        %353 = vmatprep.subr.mxu0 0.0
        %354 = vmatpush1.msra.mxu0 %v334
        %355 = vmatprep.subr.mxu0 0.0
        %356 = vmatpush1.msra.mxu0 %v335
        %357 = vmatprep.subr.mxu0 0.0
        %358 = vmatpush1.msra.mxu0 %v336
        %359 = vmatprep.subr.mxu0 0.0
        %360 = vmatpush1.msra.mxu0 %v337
        %361 = vmatprep.subr.mxu0 0.0
        %362 = vmatpush1.msra.mxu0 %v338
        %363 = vmatprep.subr.mxu0 0.0
        %364 = vmatpush1.msra.mxu0 %v339
        %365 = vmatprep.subr.mxu0 0.0
        %366 = vmatpush1.msra.mxu0 %v340
        %367 = vmatprep.subr.mxu0 0.0
        %368 = vmatpush1.msra.mxu0 %v341
        %369 = vmatprep.subr.mxu0 0.0
        %370 = vmatpush1.msra.mxu0 %v342
        %371 = vmatprep.subr.mxu0 0.0
        %372 = vmatpush1.msra.mxu0 %v343
        %373 = vmatprep.subr.mxu0 0.0
        %374 = vmatpush1.msra.mxu0 %v344
        %375 = vmatprep.subr.mxu0 0.0
        %376 = vmatpush1.msra.mxu0 %v345
        %377 = vmatprep.subr.mxu0 0.0
        %378 = vmatpush1.msra.mxu0 %v346
        %379 = vmatprep.subr.mxu0 0.0
        %380 = vmatpush1.msra.mxu0 0.0
        %381 = vmatprep.subr.mxu0 0.0
        %382 = vmatpush1.msra.mxu0 0.0
        %383 = vmatprep.subr.mxu0 0.0
        %384 = vmatpush1.msra.mxu0 0.0
        %385 = vmatprep.subr.mxu0 0.0
        %386 = vmatpush1.msra.mxu0 0.0
        %387 = vmatprep.subr.mxu0 0.0
        %388 = vmatpush1.msra.mxu0 0.0
        %389 = vmatprep.subr.mxu0 0.0
        %390 = vmatpush1.msra.mxu0 0.0
        %391 = vmatprep.subr.mxu0 0.0
        %392 = vmatpush1.msra.mxu0 0.0
        %393 = vmatprep.subr.mxu0 0.0
        %394 = vmatpush1.msra.mxu0 0.0
        %395 = vmatprep.subr.mxu0 0.0
        %396 = vmatpush1.msra.mxu0 0.0
        %397 = vmatprep.subr.mxu0 0.0
        %398 = vmatpush1.msra.mxu0 0.0
        %399 = vmatprep.subr.mxu0 0.0
        %400 = vmatpush1.msra.mxu0 0.0
        %401 = vmatprep.subr.mxu0 0.0
        %402 = vmatpush1.msra.mxu0 0.0
        %403 = vmatprep.subr.mxu0 0.0
        %404 = vmatpush1.msra.mxu0 0.0
        %405 = vmatprep.subr.mxu0 0.0
        %406 = vmatpush1.msra.mxu0 0.0
        %407 = vmatprep.subr.mxu0 0.0
        %408 = vmatpush1.msra.mxu0 0.0
        %409 = vmatprep.subr.mxu0 0.0
        %410 = vmatpush1.msra.mxu0 0.0
        %411 = vmatprep.mubr.f32.mxu0 0.0
        %412 = vmatmul.mubr.f32.gmra.mrb[0].mxu0 %v330
        %v413 = vpop.f32.mrb[0].mxu0
        %v414 = vadd.f32 0.0, %v413
        %v415 = vpop.f32.mrb[0].mxu0
        %416 = vdwg.mxu0
        %v417 = vmax.f32 %v414, 0.0
        %418 = vst [vmem:[%s242] sm:$0xff] %v417
      $region40: #{vgae_forward.3} parent=31 // pred_fallthru
        _
      %p419 = scmp.lt.s32.totalorder %s19, 1
      %s420 = scalar_select %p419, %s19, 1
      %p421 = scmp.lt.s32.totalorder %s20, 0
      %s422 = scalar_select %p421, %s20, 0
      %s423 = sadd.s32 %s422, %s420
      %s424 = smul.addr %s423, 8
      %s425 = scalar_lea.vmem %s3, %s424
      // Predicated region
      $region41: #{vgae_forward.3} parent=31 // pred_check
        %p426 = pneg %p132
      $region42: #{vgae_forward.3} parent=31 // pred_check_branch
        %428 = sbr.rel (%p426) target = $region44
      $region43: #{vgae_forward.3} parent=31 // pred_region
        _
      $region44: #{vgae_forward.3} parent=31 // pred_fallthru
        _
    $region32: #{vgae_forward.3} parent=5 // pred_fallthru
      _
    %p429 = scmp.le.s32.totalorder 2, %s9
    // Predicated region
    $region45: #{vgae_forward.3} parent=5 // pred_check
      %p430 = pneg %p429
    $region46: #{vgae_forward.3} parent=5 // pred_check_branch
      %432 = sbr.rel (%p430) target = $region48
    $region47: #{vgae_forward.3} parent=5 // pred_region
      %s433 = ssub.s32 %s9, 2
      // Predicated region
      $region49: #{vgae_forward.3} parent=47 // pred_check
        %p434 = pneg %p138
      $region50: #{vgae_forward.3} parent=47 // pred_check_branch
        %436 = sbr.rel (%p434) target = $region52
      $region51: #{vgae_forward.3} parent=47 // pred_region
        %p437 = scmp.lt.s32.totalorder %s22, 1
        %s438 = scalar_select %p437, %s22, 1
        %p439 = scmp.lt.s32.totalorder %s23, 0
        %s440 = scalar_select %p439, %s23, 0
        %s441 = sadd.s32 %s440, %s438
        %s442 = smul.addr %s441, 8
        %s443 = scalar_lea.vmem %s3, %s442
      $region52: #{vgae_forward.3} parent=47 // pred_fallthru
        _
    $region48: #{vgae_forward.3} parent=5 // pred_fallthru
      _
  $region6: #{vgae_forward.3} parent=0 // loop_footer
    %s13 = sadd.s32 1, %s9
  $region7: #{vgae_forward.3} parent=0 // loop_footer_branch
    %8 = sbr.rel target = $region3
  $region8: #{vgae_forward.3} parent=0 // loop_exit
    _

// kernel: vgae_forward.5
$region0: #{vgae_forward.5}
  #allocation0 [shape = 'u32[]', space=smem, size = 0x4, offset = 0x4, fixed_abs, tag = 'smem constant byte address 0x4 - core index']
  #allocation1 [shape = 'u32[144,128]{1,0:T(1,128)}', space=vmem, size = 0x12000, scoped, tag = 'internal scratch']
  %s0 = inlined_call_operand.vmem [shape: f32[2,8,256], index: 0, kind: input, shape index: {}, may-alias: {0,1}]
  %s1 = inlined_call_operand.vmem [shape: f32[2,8,256], index: 1, kind: input, shape index: {}, may-alias: {0,1}]
  %s2 = inlined_call_operand.hbm [shape: bf16[2,8,8], index: 2, kind: output, shape index: {}]
  %s3 = sld [smem:[#allocation0]]
  $region41: #{vgae_forward.5} parent=0
    _
  %s5 = ssub.s32 1, %s3
  %s6 = scalar_select 0, %s5, %s3
  $region1: #{vgae_forward.5} parent=0
    #allocation2 [shape = 'u8[4096]{0}', space=vmem, size = 0x1000, scoped, tag = 'output window, operand 0']
    #allocation3 [shape = 's32[2]{0}', space=sflag, size = 0x8, scoped, tag = 'scoped memory for vgae_forward.5']
    %7 = vsyncpa [#allocation3], 0
    %s8 = scalar_lea.sflag [#allocation3], 1
    %9 = vsyncpa %s8, 0
    loop: start=0, step=1, limit=4
    $region2: #{vgae_forward.5} parent=1 // loop_pre_header
      _
    $region3: #{vgae_forward.5} parent=1 // loop_header
      %s11 = sphi 0, %s15
      %p12 = scmp.ge.s32.totalorder %s11, 4
      %s18 = sphi 0, %s37
      %s19 = sphi 0, %s33
      %s20 = sphi 0, %s29
      %s21 = sphi 0, %s18
      %s22 = sphi 0, %s19
      %s23 = sphi 0, %s20
      %s24 = sphi 0, %s21
      %s25 = sphi 0, %s22
      %s26 = sphi 0, %s23
      %s42 = sphi 0, %s44
      %s45 = sphi 0, %s42
      %s46 = sphi 0, %s45
      %s62 = sphi 0, %s46
      %s70 = sphi 0, %s72
      %s73 = sphi 0, %s70
      %s74 = sphi 0, %s73
      %s90 = sphi 0, %s74
      %s100 = sphi 0, %s102
      %s103 = sphi 0, %s100
      %s104 = sphi 0, %s103
      %s120 = sphi 0, %s104
    $region4: #{vgae_forward.5} parent=1 // loop_header_branch
      %14 = sbr.rel (%p12) target = $region8
    $region5: #{vgae_forward.5} parent=1 // loop_body
      %s16 = ssub.s32 %s11, 1
      %s17 = ssub.s32 %s11, 2
      %s27 = sadd.s32 1, %s20
      %p28 = scmp.ge.s32.totalorder %s27, 1
      %s29 = scalar_select %p28, 0, %s27
      %s30 = sadd.s32 1, %s19
      %s31 = scalar_select %p28, %s30, %s19
      %p32 = scmp.ge.s32.totalorder %s31, 1
      %s33 = scalar_select %p32, 0, %s31
      %s34 = sadd.s32 1, %s18
      %s35 = scalar_select %p32, %s34, %s18
      %p36 = scmp.ge.s32.totalorder %s35, 2
      %s37 = scalar_select %p36, 0, %s35
      %s38 = ssub.s32 %s18, %s37
      %s39 = ssub.s32 %s19, %s33
      %s40 = sor.u32 %s38, %s39
      %p41 = scmp.eq.s32.totalorder %s40, 0
      %s43 = sadd.s32 %s42, 1
      %s44 = scalar_select %p41, %s42, %s43
      %p47 = pneg %p41
      %p48 = scmp.eq.s32.totalorder %s11, 1
      %p49 = por %p47, %p48
      %p50 = scmp.ne.s32.totalorder %s42, %s45
      %p51 = scmp.eq.s32.totalorder %s11, 0
      %p52 = por %p50, %p51
      %p53 = scmp.ne.s32.totalorder %s42, %s45
      %p54 = scmp.eq.s32.totalorder %s16, 1
      %p55 = por %p53, %p54
      %p56 = scmp.ne.s32.totalorder %s45, %s46
      %p57 = scmp.eq.s32.totalorder %s16, 0
      %p58 = por %p56, %p57
      %p59 = scmp.ne.s32.totalorder %s45, %s46
      %p60 = scmp.eq.s32.totalorder %s17, 1
      %p61 = por %p59, %p60
      %p63 = scmp.ne.s32.totalorder %s46, %s62
      %p64 = scmp.eq.s32.totalorder %s17, 0
      %p65 = por %p63, %p64
      %s66 = ssub.s32 %s18, %s37
      %s67 = ssub.s32 %s20, %s29
      %s68 = sor.u32 %s66, %s67
      %p69 = scmp.eq.s32.totalorder %s68, 0
      %s71 = sadd.s32 %s70, 1
      %s72 = scalar_select %p69, %s70, %s71
      %p75 = pneg %p69
      %p76 = scmp.eq.s32.totalorder %s11, 1
      %p77 = por %p75, %p76
      %p78 = scmp.ne.s32.totalorder %s70, %s73
      %p79 = scmp.eq.s32.totalorder %s11, 0
      %p80 = por %p78, %p79
      %p81 = scmp.ne.s32.totalorder %s70, %s73
      %p82 = scmp.eq.s32.totalorder %s16, 1
      %p83 = por %p81, %p82
      %p84 = scmp.ne.s32.totalorder %s73, %s74
      %p85 = scmp.eq.s32.totalorder %s16, 0
      %p86 = por %p84, %p85
      %p87 = scmp.ne.s32.totalorder %s73, %s74
      %p88 = scmp.eq.s32.totalorder %s17, 1
      %p89 = por %p87, %p88
      %p91 = scmp.ne.s32.totalorder %s74, %s90
      %p92 = scmp.eq.s32.totalorder %s17, 0
      %p93 = por %p91, %p92
      %s94 = ssub.s32 %s18, %s37
      %s95 = ssub.s32 %s19, %s33
      %s96 = sor.u32 %s94, %s95
      %s97 = ssub.s32 %s20, %s29
      %s98 = sor.u32 %s96, %s97
      %p99 = scmp.eq.s32.totalorder %s98, 0
      %s101 = sadd.s32 %s100, 1
      %s102 = scalar_select %p99, %s100, %s101
      %p105 = pneg %p99
      %p106 = scmp.eq.s32.totalorder %s11, 1
      %p107 = por %p105, %p106
      %p108 = scmp.ne.s32.totalorder %s100, %s103
      %p109 = scmp.eq.s32.totalorder %s11, 0
      %p110 = por %p108, %p109
      %p111 = scmp.ne.s32.totalorder %s100, %s103
      %p112 = scmp.eq.s32.totalorder %s16, 1
      %p113 = por %p111, %p112
      %p114 = scmp.ne.s32.totalorder %s103, %s104
      %p115 = scmp.eq.s32.totalorder %s16, 0
      %p116 = por %p114, %p115
      %p117 = scmp.ne.s32.totalorder %s103, %s104
      %p118 = scmp.eq.s32.totalorder %s17, 1
      %p119 = por %p117, %p118
      %p121 = scmp.ne.s32.totalorder %s104, %s120
      %p122 = scmp.eq.s32.totalorder %s17, 0
      %p123 = por %p121, %p122
      %p124 = scmp.le.s32.totalorder 1, %s11
      %p125 = scmp.lt.s32.totalorder %s11, 3
      %p126 = pnand %p124, %p125
      %p127 = pneg %p126
      // Predicated region
      $region9: #{vgae_forward.5} parent=5 // pred_check
        _
      $region10: #{vgae_forward.5} parent=5 // pred_check_branch
        %129 = sbr.rel (%p126) target = $region12
      $region11: #{vgae_forward.5} parent=5 // pred_region
        %s130 = ssub.s32 %s11, 1
      $region12: #{vgae_forward.5} parent=5 // pred_fallthru
        _
      %p131 = scmp.lt.s32.totalorder %s11, 2
      // Predicated region
      $region13: #{vgae_forward.5} parent=5 // pred_check
        %p132 = pneg %p131
      $region14: #{vgae_forward.5} parent=5 // pred_check_branch
        %134 = sbr.rel (%p132) target = $region16
      $region15: #{vgae_forward.5} parent=5 // pred_region
        // Predicated region
        $region17: #{vgae_forward.5} parent=15 // pred_check
          %p135 = pneg %p52
        $region18: #{vgae_forward.5} parent=15 // pred_check_branch
          %137 = sbr.rel (%p135) target = $region20
        $region19: #{vgae_forward.5} parent=15 // pred_region
          %p138 = scmp.lt.s32.totalorder %s18, 1
          %s139 = scalar_select %p138, %s18, 1
          %p140 = scmp.lt.s32.totalorder %s19, 0
          %s141 = scalar_select %p140, %s19, 0
          %s142 = smul.addr %s141, 2
          %s143 = smul.addr %s139, 2
          %s144 = sadd.s32 %s142, %s143
          %s145 = smul.addr %s144, 8
          %s146 = scalar_lea.vmem %s0, %s145
        $region20: #{vgae_forward.5} parent=15 // pred_fallthru
          _
        // Predicated region
        $region21: #{vgae_forward.5} parent=15 // pred_check
          %p147 = pneg %p80
        $region22: #{vgae_forward.5} parent=15 // pred_check_branch
          %149 = sbr.rel (%p147) target = $region24
        $region23: #{vgae_forward.5} parent=15 // pred_region
          %p150 = scmp.lt.s32.totalorder %s18, 1
          %s151 = scalar_select %p150, %s18, 1
          %p152 = scmp.lt.s32.totalorder %s20, 0
          %s153 = scalar_select %p152, %s20, 0
          %s154 = smul.addr %s153, 2
          %s155 = smul.addr %s151, 2
          %s156 = sadd.s32 %s154, %s155
          %s157 = smul.addr %s156, 8
          %s158 = scalar_lea.vmem %s1, %s157
        $region24: #{vgae_forward.5} parent=15 // pred_fallthru
          _
      $region16: #{vgae_forward.5} parent=5 // pred_fallthru
        _
      %p159 = scmp.le.s32.totalorder 1, %s11
      %p160 = scmp.lt.s32.totalorder %s11, 3
      %p161 = pnand %p159, %p160
      %p162 = pneg %p161
      // Predicated region
      $region25: #{vgae_forward.5} parent=5 // pred_check
        _
      $region26: #{vgae_forward.5} parent=5 // pred_check_branch
        %164 = sbr.rel (%p161) target = $region28
      $region27: #{vgae_forward.5} parent=5 // pred_region
        %s165 = ssub.s32 %s11, 1
        %p166 = scmp.lt.s32.totalorder %s21, 1
        %s167 = scalar_select %p166, %s21, 1
        %p168 = scmp.lt.s32.totalorder %s22, 0
        %s169 = scalar_select %p168, %s22, 0
        %s170 = smul.addr %s169, 2
        %s171 = smul.addr %s167, 2
        %s172 = sadd.s32 %s170, %s171
        %s173 = smul.addr %s172, 8
        %s174 = scalar_lea.vmem %s0, %s173
        %p175 = pneg %p58
        %p176 = pneg %p55
        %p177 = scmp.lt.s32.totalorder %s21, 1
        %s178 = scalar_select %p177, %s21, 1
        %p179 = scmp.lt.s32.totalorder %s23, 0
        %s180 = scalar_select %p179, %s23, 0
        %s181 = smul.addr %s180, 2
        %s182 = smul.addr %s178, 2
        %s183 = sadd.s32 %s181, %s182
        %s184 = smul.addr %s183, 8
        %s185 = scalar_lea.vmem %s1, %s184
        %p186 = pneg %p86
        %p187 = pneg %p83
        %p188 = pneg %p116
        %p189 = pneg %p113
        %s190 = sand.u32 %s103, 1
        %s191 = scalar_lea.sflag [#allocation3], %s190
        %s192 = sand.u32 %s103, 1
        %s193 = smul.addr %s192, 4
        %s194 = scalar_lea.vmem [#allocation2], %s193
        %p195 = scmp.lt.s32.totalorder %s21, 1
        %s196 = scalar_select %p195, %s21, 1
        %p197 = scmp.lt.s32.totalorder %s22, 0
        %s198 = scalar_select %p197, %s22, 0
        %s199 = smul.addr %s198, 2
        %s200 = smul.addr %s196, 2
        %s201 = sadd.s32 %s199, %s200
        %s202 = smul.addr %s201, 8
        %s203 = scalar_lea.vmem %s0, %s202
        %p204 = scmp.lt.s32.totalorder %s21, 1
        %s205 = scalar_select %p204, %s21, 1
        %p206 = scmp.lt.s32.totalorder %s23, 0
        %s207 = scalar_select %p206, %s23, 0
        %s208 = smul.addr %s207, 2
        %s209 = smul.addr %s205, 2
        %s210 = sadd.s32 %s208, %s209
        %s211 = smul.addr %s210, 8
        %s212 = scalar_lea.vmem %s1, %s211
        %v213 = vld [vmem:[%s203] sm:$0xff]
        %v214 = vld [vmem:[%s212] sm:$0xff]
        %215 = vmatprep.subr.mxu0 0.0
        %216 = vmatpush1.xpose.msra.mxu0 %v214
        %217 = vmatprep.subr.mxu0 0.0
        %218 = vmatpush1.xpose.msra.mxu0 0.0
        %219 = vmatprep.subr.mxu0 0.0
        %220 = vmatpush1.xpose.msra.mxu0 0.0
        %221 = vmatprep.subr.mxu0 0.0
        %222 = vmatpush1.xpose.msra.mxu0 0.0
        %223 = vmatprep.subr.mxu0 0.0
        %224 = vmatpush1.xpose.msra.mxu0 0.0
        %225 = vmatprep.subr.mxu0 0.0
        %226 = vmatpush1.xpose.msra.mxu0 0.0
        %227 = vmatprep.subr.mxu0 0.0
        %228 = vmatpush1.xpose.msra.mxu0 0.0
        %229 = vmatprep.subr.mxu0 0.0
        %230 = vmatpush1.xpose.msra.mxu0 0.0
        %231 = vmatprep.subr.mxu0 0.0
        %232 = vmatpush1.xpose.msra.mxu0 0.0
        %233 = vmatprep.subr.mxu0 0.0
        %234 = vmatpush1.xpose.msra.mxu0 0.0
        %235 = vmatprep.subr.mxu0 0.0
        %236 = vmatpush1.xpose.msra.mxu0 0.0
        %237 = vmatprep.subr.mxu0 0.0
        %238 = vmatpush1.xpose.msra.mxu0 0.0
        %239 = vmatprep.subr.mxu0 0.0
        %240 = vmatpush1.xpose.msra.mxu0 0.0
        %241 = vmatprep.subr.mxu0 0.0
        %242 = vmatpush1.xpose.msra.mxu0 0.0
        %243 = vmatprep.subr.mxu0 0.0
        %244 = vmatpush1.xpose.msra.mxu0 0.0
        %245 = vmatprep.subr.mxu0 0.0
        %246 = vmatpush1.xpose.msra.mxu0 0.0
        %247 = vmatprep.subr.mxu0 0.0
        %248 = vmatpush1.xpose.msra.mxu0 0.0
        %249 = vmatprep.subr.mxu0 0.0
        %250 = vmatpush1.xpose.msra.mxu0 0.0
        %251 = vmatprep.subr.mxu0 0.0
        %252 = vmatpush1.xpose.msra.mxu0 0.0
        %253 = vmatprep.subr.mxu0 0.0
        %254 = vmatpush1.xpose.msra.mxu0 0.0
        %255 = vmatprep.subr.mxu0 0.0
        %256 = vmatpush1.xpose.msra.mxu0 0.0
        %257 = vmatprep.subr.mxu0 0.0
        %258 = vmatpush1.xpose.msra.mxu0 0.0
        %259 = vmatprep.subr.mxu0 0.0
        %260 = vmatpush1.xpose.msra.mxu0 0.0
        %261 = vmatprep.subr.mxu0 0.0
        %262 = vmatpush1.xpose.msra.mxu0 0.0
        %263 = vmatprep.subr.mxu0 0.0
        %264 = vmatpush1.xpose.msra.mxu0 0.0
        %265 = vmatprep.subr.mxu0 0.0
        %266 = vmatpush1.xpose.msra.mxu0 0.0
        %267 = vmatprep.subr.mxu0 0.0
        %268 = vmatpush1.xpose.msra.mxu0 0.0
        %269 = vmatprep.subr.mxu0 0.0
        %270 = vmatpush1.xpose.msra.mxu0 0.0
        %271 = vmatprep.subr.mxu0 0.0
        %272 = vmatpush1.xpose.msra.mxu0 0.0
        %273 = vmatprep.subr.mxu0 0.0
        %274 = vmatpush1.xpose.msra.mxu0 0.0
        %275 = vmatprep.subr.mxu0 0.0
        %276 = vmatpush1.xpose.msra.mxu0 0.0
        %277 = vmatprep.subr.mxu0 0.0
        %278 = vmatpush1.xpose.msra.mxu0 0.0
        %279 = vmatprep.mubr.f32.mxu0 0.0
        %280 = vmatmul.mubr.f32.gmra.mrb[0].mxu0 %v213
        %v281 = vpop.f32.mrb[0].mxu0
        %v282 = vadd.f32 0.0, %v281
        %v283 = vpop.f32.mrb[0].mxu0
        %284 = vdwg.mxu0
        %v285 = vpack.c.bf16 %v282, %v282
        %vm286 = vcmask 60416
        %287 = vst.msk [vmem:[%s194] sm:$0xf] %vm286, %v285
        %s288 = sand.u32 %s103, 1
        %s289 = scalar_lea.sflag [#allocation3], %s288
        %s290 = sand.u32 %s103, 1
        %s291 = smul.addr %s290, 4
        %s292 = scalar_lea.vmem [#allocation2], %s291
        // Predicated region
        $region29: #{vgae_forward.5} parent=27 // pred_check
          %p293 = pneg %p113
        $region30: #{vgae_forward.5} parent=27 // pred_check_branch
          %295 = sbr.rel (%p293) target = $region32
        $region31: #{vgae_forward.5} parent=27 // pred_region
          %s297 = ssub.s32 64, 64
          %298 = vsyncadd %s289, %s297
          %s299 = sadd.s32 %s23, %s22
          %s300 = sadd.s32 %s299, %s21
          %s301 = smul.addr %s300, 64
          %s302 = scalar_lea.hbm %s2, %s301
          %s304 = sshll.u32 %s292, 4
          %s305 = int_to_ptr.vmem [resolvable:$true] %s304
          %307 = dma.vmem_to_hbm [thread:$0]  %s305, 64, %s302, %s289
        $region32: #{vgae_forward.5} parent=27 // pred_fallthru
          _
      $region28: #{vgae_forward.5} parent=5 // pred_fallthru
        _
      %p308 = scmp.le.s32.totalorder 2, %s11
      // Predicated region
      $region33: #{vgae_forward.5} parent=5 // pred_check
        %p309 = pneg %p308
      $region34: #{vgae_forward.5} parent=5 // pred_check_branch
        %311 = sbr.rel (%p309) target = $region36
      $region35: #{vgae_forward.5} parent=5 // pred_region
        %s312 = ssub.s32 %s11, 2
        // Predicated region
        $region37: #{vgae_forward.5} parent=35 // pred_check
          %p313 = pneg %p119
        $region38: #{vgae_forward.5} parent=35 // pred_check_branch
          %315 = sbr.rel (%p313) target = $region40
        $region39: #{vgae_forward.5} parent=35 // pred_region
          %s316 = sand.u32 %s104, 1
          %s317 = scalar_lea.sflag [#allocation3], %s316
          %s318 = sand.u32 %s104, 1
          %s319 = smul.addr %s318, 4
          %s320 = scalar_lea.vmem [#allocation2], %s319
          %321 = dma.done %s317, 64
        $region40: #{vgae_forward.5} parent=35 // pred_fallthru
          _
      $region36: #{vgae_forward.5} parent=5 // pred_fallthru
        _
    $region6: #{vgae_forward.5} parent=1 // loop_footer
      %s15 = sadd.s32 1, %s11
    $region7: #{vgae_forward.5} parent=1 // loop_footer_branch
      %10 = sbr.rel target = $region3
    $region8: #{vgae_forward.5} parent=1 // loop_exit
      _
    %322 = vsyncpa [#allocation3], 1
    %s323 = scalar_lea.sflag [#allocation3], 1
    %324 = vsyncpa %s323, 1

// kernel: vgae_forward.4
$region0: #{vgae_forward.4}
  #allocation0 [shape = 'u32[]', space=smem, size = 0x4, offset = 0x4, fixed_abs, tag = 'smem constant byte address 0x4 - core index']
  #allocation1 [shape = 'u32[144,128]{1,0:T(1,128)}', space=vmem, size = 0x12000, scoped, tag = 'internal scratch']
  #allocation2 [shape = 'f32[8,128]{1,0:T(8,128)}', space=vmem, size = 0x1000, scoped, tag = 'scratch operand']
  %s0 = inlined_call_operand.vmem [shape: f32[2,8,128], index: 0, kind: input, shape index: {}]
  %s1 = inlined_call_operand.vmem [shape: f32[2,8,8], index: 1, kind: input, shape index: {}]
  %s2 = inlined_call_operand.vmem [shape: f32[128,256], index: 2, kind: input, shape index: {}]
  %s3 = inlined_call_operand.vmem [shape: f32[2,8,256], index: 3, kind: output, shape index: {}]
  %s4 = sld [smem:[#allocation0]]
  $region53: #{vgae_forward.4} parent=0
    _
  %s6 = ssub.s32 1, %s4
  %s7 = scalar_select 0, %s6, %s4
  loop: start=0, step=1, limit=4
  $region2: #{vgae_forward.4} parent=0 // loop_pre_header
    _
  $region3: #{vgae_forward.4} parent=0 // loop_header
    %s9 = sphi 0, %s13
    %p10 = scmp.ge.s32.totalorder %s9, 4
    %s16 = sphi 0, %s35
    %s17 = sphi 0, %s31
    %s18 = sphi 0, %s27
    %s19 = sphi 0, %s16
    %s20 = sphi 0, %s17
    %s21 = sphi 0, %s18
    %s22 = sphi 0, %s19
    %s23 = sphi 0, %s20
    %s24 = sphi 0, %s21
    %s40 = sphi 0, %s42
    %s43 = sphi 0, %s40
    %s44 = sphi 0, %s43
    %s60 = sphi 0, %s44
    %s70 = sphi 0, %s72
    %s73 = sphi 0, %s70
    %s74 = sphi 0, %s73
    %s90 = sphi 0, %s74
    %s94 = sphi 0, %s94
    %s96 = sphi 0, %s94
    %s97 = sphi 0, %s96
    %s111 = sphi 0, %s97
    %s119 = sphi 0, %s121
    %s122 = sphi 0, %s119
    %s123 = sphi 0, %s122
    %s139 = sphi 0, %s123
  $region4: #{vgae_forward.4} parent=0 // loop_header_branch
    %12 = sbr.rel (%p10) target = $region8
  $region5: #{vgae_forward.4} parent=0 // loop_body
    %s14 = ssub.s32 %s9, 1
    %s15 = ssub.s32 %s9, 2
    %s25 = sadd.s32 1, %s18
    %p26 = scmp.ge.s32.totalorder %s25, 1
    %s27 = scalar_select %p26, 0, %s25
    %s28 = sadd.s32 1, %s17
    %s29 = scalar_select %p26, %s28, %s17
    %p30 = scmp.ge.s32.totalorder %s29, 1
    %s31 = scalar_select %p30, 0, %s29
    %s32 = sadd.s32 1, %s16
    %s33 = scalar_select %p30, %s32, %s16
    %p34 = scmp.ge.s32.totalorder %s33, 2
    %s35 = scalar_select %p34, 0, %s33
    %s36 = ssub.s32 %s16, %s35
    %s37 = ssub.s32 %s18, %s27
    %s38 = sor.u32 %s36, %s37
    %p39 = scmp.eq.s32.totalorder %s38, 0
    %s41 = sadd.s32 %s40, 1
    %s42 = scalar_select %p39, %s40, %s41
    %p45 = pneg %p39
    %p46 = scmp.eq.s32.totalorder %s9, 1
    %p47 = por %p45, %p46
    %p48 = scmp.ne.s32.totalorder %s40, %s43
    %p49 = scmp.eq.s32.totalorder %s9, 0
    %p50 = por %p48, %p49
    %p51 = scmp.ne.s32.totalorder %s40, %s43
    %p52 = scmp.eq.s32.totalorder %s14, 1
    %p53 = por %p51, %p52
    %p54 = scmp.ne.s32.totalorder %s43, %s44
    %p55 = scmp.eq.s32.totalorder %s14, 0
    %p56 = por %p54, %p55
    %p57 = scmp.ne.s32.totalorder %s43, %s44
    %p58 = scmp.eq.s32.totalorder %s15, 1
    %p59 = por %p57, %p58
    %p61 = scmp.ne.s32.totalorder %s44, %s60
    %p62 = scmp.eq.s32.totalorder %s15, 0
    %p63 = por %p61, %p62
    %s64 = ssub.s32 %s16, %s35
    %s65 = ssub.s32 %s17, %s31
    %s66 = sor.u32 %s64, %s65
    %s67 = ssub.s32 %s18, %s27
    %s68 = sor.u32 %s66, %s67
    %p69 = scmp.eq.s32.totalorder %s68, 0
    %s71 = sadd.s32 %s70, 1
    %s72 = scalar_select %p69, %s70, %s71
    %p75 = pneg %p69
    %p76 = scmp.eq.s32.totalorder %s9, 1
    %p77 = por %p75, %p76
    %p78 = scmp.ne.s32.totalorder %s70, %s73
    %p79 = scmp.eq.s32.totalorder %s9, 0
    %p80 = por %p78, %p79
    %p81 = scmp.ne.s32.totalorder %s70, %s73
    %p82 = scmp.eq.s32.totalorder %s14, 1
    %p83 = por %p81, %p82
    %p84 = scmp.ne.s32.totalorder %s73, %s74
    %p85 = scmp.eq.s32.totalorder %s14, 0
    %p86 = por %p84, %p85
    %p87 = scmp.ne.s32.totalorder %s73, %s74
    %p88 = scmp.eq.s32.totalorder %s15, 1
    %p89 = por %p87, %p88
    %p91 = scmp.ne.s32.totalorder %s74, %s90
    %p92 = scmp.eq.s32.totalorder %s15, 0
    %p93 = por %p91, %p92
    %s95 = sadd.s32 %s94, 1
    %p98 = scmp.eq.s32.totalorder %s9, 1
    %p99 = scmp.ne.s32.totalorder %s94, %s96
    %p100 = scmp.eq.s32.totalorder %s9, 0
    %p101 = por %p99, %p100
    %p102 = scmp.ne.s32.totalorder %s94, %s96
    %p103 = scmp.eq.s32.totalorder %s14, 1
    %p104 = por %p102, %p103
    %p105 = scmp.ne.s32.totalorder %s96, %s97
    %p106 = scmp.eq.s32.totalorder %s14, 0
    %p107 = por %p105, %p106
    %p108 = scmp.ne.s32.totalorder %s96, %s97
    %p109 = scmp.eq.s32.totalorder %s15, 1
    %p110 = por %p108, %p109
    %p112 = scmp.ne.s32.totalorder %s97, %s111
    %p113 = scmp.eq.s32.totalorder %s15, 0
    %p114 = por %p112, %p113
    %s115 = ssub.s32 %s16, %s35
    %s116 = ssub.s32 %s17, %s31
    %s117 = sor.u32 %s115, %s116
    %p118 = scmp.eq.s32.totalorder %s117, 0
    %s120 = sadd.s32 %s119, 1
    %s121 = scalar_select %p118, %s119, %s120
    %p124 = pneg %p118
    %p125 = scmp.eq.s32.totalorder %s9, 1
    %p126 = por %p124, %p125
    %p127 = scmp.ne.s32.totalorder %s119, %s122
    %p128 = scmp.eq.s32.totalorder %s9, 0
    %p129 = por %p127, %p128
    %p130 = scmp.ne.s32.totalorder %s119, %s122
    %p131 = scmp.eq.s32.totalorder %s14, 1
    %p132 = por %p130, %p131
    %p133 = scmp.ne.s32.totalorder %s122, %s123
    %p134 = scmp.eq.s32.totalorder %s14, 0
    %p135 = por %p133, %p134
    %p136 = scmp.ne.s32.totalorder %s122, %s123
    %p137 = scmp.eq.s32.totalorder %s15, 1
    %p138 = por %p136, %p137
    %p140 = scmp.ne.s32.totalorder %s123, %s139
    %p141 = scmp.eq.s32.totalorder %s15, 0
    %p142 = por %p140, %p141
    %p143 = scmp.le.s32.totalorder 1, %s9
    %p144 = scmp.lt.s32.totalorder %s9, 3
    %p145 = pnand %p143, %p144
    %p146 = pneg %p145
    // Predicated region
    $region9: #{vgae_forward.4} parent=5 // pred_check
      _
    $region10: #{vgae_forward.4} parent=5 // pred_check_branch
      %148 = sbr.rel (%p145) target = $region12
    $region11: #{vgae_forward.4} parent=5 // pred_region
      %s149 = ssub.s32 %s9, 1
      // Predicated region
      $region13: #{vgae_forward.4} parent=11 // pred_check
        %p150 = pneg %p107
      $region14: #{vgae_forward.4} parent=11 // pred_check_branch
        %152 = sbr.rel (%p150) target = $region16
      $region15: #{vgae_forward.4} parent=11 // pred_region
        _
      $region16: #{vgae_forward.4} parent=11 // pred_fallthru
        _
    $region12: #{vgae_forward.4} parent=5 // pred_fallthru
      _
    %p153 = scmp.lt.s32.totalorder %s9, 2
    // Predicated region
    $region17: #{vgae_forward.4} parent=5 // pred_check
      %p154 = pneg %p153
    $region18: #{vgae_forward.4} parent=5 // pred_check_branch
      %156 = sbr.rel (%p154) target = $region20
    $region19: #{vgae_forward.4} parent=5 // pred_region
      // Predicated region
      $region21: #{vgae_forward.4} parent=19 // pred_check
        %p157 = pneg %p50
      $region22: #{vgae_forward.4} parent=19 // pred_check_branch
        %159 = sbr.rel (%p157) target = $region24
      $region23: #{vgae_forward.4} parent=19 // pred_region
        %p160 = scmp.lt.s32.totalorder %s16, 1
        %s161 = scalar_select %p160, %s16, 1
        %p162 = scmp.lt.s32.totalorder %s18, 0
        %s163 = scalar_select %p162, %s18, 0
        %s164 = sadd.s32 %s163, %s161
        %s165 = smul.addr %s164, 8
        %s166 = scalar_lea.vmem %s0, %s165
      $region24: #{vgae_forward.4} parent=19 // pred_fallthru
        _
      // Predicated region
      $region25: #{vgae_forward.4} parent=19 // pred_check
        %p167 = pneg %p80
      $region26: #{vgae_forward.4} parent=19 // pred_check_branch
        %169 = sbr.rel (%p167) target = $region28
      $region27: #{vgae_forward.4} parent=19 // pred_region
        %p170 = scmp.lt.s32.totalorder %s16, 1
        %s171 = scalar_select %p170, %s16, 1
        %p172 = scmp.lt.s32.totalorder %s17, 0
        %s173 = scalar_select %p172, %s17, 0
        %p174 = scmp.lt.s32.totalorder %s18, 0
        %s175 = scalar_select %p174, %s18, 0
        %s176 = sadd.s32 %s175, %s173
        %s177 = sadd.s32 %s176, %s171
        %s178 = smul.addr %s177, 8
        %s179 = scalar_lea.vmem %s1, %s178
      $region28: #{vgae_forward.4} parent=19 // pred_fallthru
        _
    $region20: #{vgae_forward.4} parent=5 // pred_fallthru
      _
    %p180 = scmp.le.s32.totalorder 1, %s9
    %p181 = scmp.lt.s32.totalorder %s9, 3
    %p182 = pnand %p180, %p181
    %p183 = pneg %p182
    // Predicated region
    $region29: #{vgae_forward.4} parent=5 // pred_check
      _
    $region30: #{vgae_forward.4} parent=5 // pred_check_branch
      %185 = sbr.rel (%p182) target = $region32
    $region31: #{vgae_forward.4} parent=5 // pred_region
      %s186 = ssub.s32 %s9, 1
      %p187 = scmp.lt.s32.totalorder %s19, 1
      %s188 = scalar_select %p187, %s19, 1
      %p189 = scmp.lt.s32.totalorder %s21, 0
      %s190 = scalar_select %p189, %s21, 0
      %s191 = sadd.s32 %s190, %s188
      %s192 = smul.addr %s191, 8
      %s193 = scalar_lea.vmem %s0, %s192
      %p194 = pneg %p56
      %p195 = pneg %p53
      %p196 = scmp.lt.s32.totalorder %s19, 1
      %s197 = scalar_select %p196, %s19, 1
      %p198 = scmp.lt.s32.totalorder %s20, 0
      %s199 = scalar_select %p198, %s20, 0
      %p200 = scmp.lt.s32.totalorder %s21, 0
      %s201 = scalar_select %p200, %s21, 0
      %s202 = sadd.s32 %s201, %s199
      %s203 = sadd.s32 %s202, %s197
      %s204 = smul.addr %s203, 8
      %s205 = scalar_lea.vmem %s1, %s204
      %p206 = pneg %p86
      %p207 = pneg %p83
      %p208 = pneg %p107
      %p209 = pneg %p104
      %p210 = pneg %p135
      %p211 = pneg %p132
      %p212 = scmp.lt.s32.totalorder %s19, 1
      %s213 = scalar_select %p212, %s19, 1
      %p214 = scmp.lt.s32.totalorder %s20, 0
      %s215 = scalar_select %p214, %s20, 0
      %s216 = smul.addr %s215, 2
      %s217 = smul.addr %s213, 2
      %s218 = sadd.s32 %s216, %s217
      %s219 = smul.addr %s218, 8
      %s220 = scalar_lea.vmem %s3, %s219
      %p221 = scmp.lt.s32.totalorder %s19, 1
      %s222 = scalar_select %p221, %s19, 1
      %p223 = scmp.lt.s32.totalorder %s21, 0
      %s224 = scalar_select %p223, %s21, 0
      %s225 = sadd.s32 %s224, %s222
      %s226 = smul.addr %s225, 8
      %s227 = scalar_lea.vmem %s0, %s226
      %p228 = scmp.lt.s32.totalorder %s19, 1
      %s229 = scalar_select %p228, %s19, 1
      %p230 = scmp.lt.s32.totalorder %s20, 0
      %s231 = scalar_select %p230, %s20, 0
      %p232 = scmp.lt.s32.totalorder %s21, 0
      %s233 = scalar_select %p232, %s21, 0
      %s234 = sadd.s32 %s233, %s231
      %s235 = sadd.s32 %s234, %s229
      %s236 = smul.addr %s235, 8
      %s237 = scalar_lea.vmem %s1, %s236
      %p238 = scmp.lt.s32.totalorder %s19, 1
      %s239 = scalar_select %p238, %s19, 1
      %p240 = scmp.lt.s32.totalorder %s20, 0
      %s241 = scalar_select %p240, %s20, 0
      %s242 = smul.addr %s241, 2
      %s243 = smul.addr %s239, 2
      %s244 = sadd.s32 %s242, %s243
      %s245 = smul.addr %s244, 8
      %s246 = scalar_lea.vmem %s3, %s245
      %p247 = scmp.eq.s32.totalorder %s21, 0
      // Predicated region
      $region33: #{vgae_forward.4} parent=31 // pred_check
        %p248 = pneg %p247
      $region34: #{vgae_forward.4} parent=31 // pred_check_branch
        %250 = sbr.rel (%p248) target = $region36
      $region35: #{vgae_forward.4} parent=31 // pred_region
        %251 = vst [vmem:[#allocation2] sm:$0xff] 0.0
      $region36: #{vgae_forward.4} parent=31 // pred_fallthru
        _
      %v252 = vld [vmem:[#allocation2] sm:$0xff]
      %v253 = vld [vmem:[%s237] sm:$0xff]
      %v254 = vld [vmem:[%s227] sm:$0xff]
      %vm255 = vcmask 64512
      %v257 = vsel %vm255, %v253, 0
      %259 = vmatprep.subr.mxu0 0.0
      %260 = vmatpush1.msra.mxu0 %v254
      %261 = vmatprep.subr.mxu0 0.0
      %262 = vmatpush1.msra.mxu0 0.0
      %263 = vmatprep.subr.mxu0 0.0
      %264 = vmatpush1.msra.mxu0 0.0
      %265 = vmatprep.subr.mxu0 0.0
      %266 = vmatpush1.msra.mxu0 0.0
      %267 = vmatprep.subr.mxu0 0.0
      %268 = vmatpush1.msra.mxu0 0.0
      %269 = vmatprep.subr.mxu0 0.0
      %270 = vmatpush1.msra.mxu0 0.0
      %271 = vmatprep.subr.mxu0 0.0
      %272 = vmatpush1.msra.mxu0 0.0
      %273 = vmatprep.subr.mxu0 0.0
      %274 = vmatpush1.msra.mxu0 0.0
      %275 = vmatprep.subr.mxu0 0.0
      %276 = vmatpush1.msra.mxu0 0.0
      %277 = vmatprep.subr.mxu0 0.0
      %278 = vmatpush1.msra.mxu0 0.0
      %279 = vmatprep.subr.mxu0 0.0
      %280 = vmatpush1.msra.mxu0 0.0
      %281 = vmatprep.subr.mxu0 0.0
      %282 = vmatpush1.msra.mxu0 0.0
      %283 = vmatprep.subr.mxu0 0.0
      %284 = vmatpush1.msra.mxu0 0.0
      %285 = vmatprep.subr.mxu0 0.0
      %286 = vmatpush1.msra.mxu0 0.0
      %287 = vmatprep.subr.mxu0 0.0
      %288 = vmatpush1.msra.mxu0 0.0
      %289 = vmatprep.subr.mxu0 0.0
      %290 = vmatpush1.msra.mxu0 0.0
      %291 = vmatprep.subr.mxu0 0.0
      %292 = vmatpush1.msra.mxu0 0.0
      %293 = vmatprep.subr.mxu0 0.0
      %294 = vmatpush1.msra.mxu0 0.0
      %295 = vmatprep.subr.mxu0 0.0
      %296 = vmatpush1.msra.mxu0 0.0
      %297 = vmatprep.subr.mxu0 0.0
      %298 = vmatpush1.msra.mxu0 0.0
      %299 = vmatprep.subr.mxu0 0.0
      %300 = vmatpush1.msra.mxu0 0.0
      %301 = vmatprep.subr.mxu0 0.0
      %302 = vmatpush1.msra.mxu0 0.0
      %303 = vmatprep.subr.mxu0 0.0
      %304 = vmatpush1.msra.mxu0 0.0
      %305 = vmatprep.subr.mxu0 0.0
      %306 = vmatpush1.msra.mxu0 0.0
      %307 = vmatprep.subr.mxu0 0.0
      %308 = vmatpush1.msra.mxu0 0.0
      %309 = vmatprep.subr.mxu0 0.0
      %310 = vmatpush1.msra.mxu0 0.0
      %311 = vmatprep.subr.mxu0 0.0
      %312 = vmatpush1.msra.mxu0 0.0
      %313 = vmatprep.subr.mxu0 0.0
      %314 = vmatpush1.msra.mxu0 0.0
      %315 = vmatprep.subr.mxu0 0.0
      %316 = vmatpush1.msra.mxu0 0.0
      %317 = vmatprep.subr.mxu0 0.0
      %318 = vmatpush1.msra.mxu0 0.0
      %319 = vmatprep.subr.mxu0 0.0
      %320 = vmatpush1.msra.mxu0 0.0
      %321 = vmatprep.subr.mxu0 0.0
      %322 = vmatpush1.msra.mxu0 0.0
      %323 = vmatprep.mubr.f32.mxu0 0.0
      %324 = vmatmul.mubr.f32.gmra.mrb[0].mxu0 %v257
      %v325 = vpop.f32.mrb[0].mxu0
      %v326 = vadd.f32 0.0, %v325
      %v327 = vpop.f32.mrb[0].mxu0
      %328 = vdwg.mxu0
      %v329 = vadd.f32 %v252, %v326
      %330 = vst [vmem:[#allocation2] sm:$0xff] %v329
      // Predicated region
      $region37: #{vgae_forward.4} parent=31 // pred_check
        %p331 = pneg %p247
      $region38: #{vgae_forward.4} parent=31 // pred_check_branch
        %333 = sbr.rel (%p331) target = $region40
      $region39: #{vgae_forward.4} parent=31 // pred_region
        %v334 = vld [vmem:[#allocation2] sm:$0xff]
        %v335 = vld [vmem:[%s2] sm:$0xff]
        %v336 = vld [vmem:[%s2 + $0x8] sm:$0xff]
        %v337 = vld [vmem:[%s2 + $0x10] sm:$0xff]
        %v338 = vld [vmem:[%s2 + $0x18] sm:$0xff]
        %v339 = vld [vmem:[%s2 + $0x20] sm:$0xff]
        %v340 = vld [vmem:[%s2 + $0x28] sm:$0xff]
        %v341 = vld [vmem:[%s2 + $0x30] sm:$0xff]
        %v342 = vld [vmem:[%s2 + $0x38] sm:$0xff]
        %v343 = vld [vmem:[%s2 + $0x40] sm:$0xff]
        %v344 = vld [vmem:[%s2 + $0x48] sm:$0xff]
        %v345 = vld [vmem:[%s2 + $0x50] sm:$0xff]
        %v346 = vld [vmem:[%s2 + $0x58] sm:$0xff]
        %v347 = vld [vmem:[%s2 + $0x60] sm:$0xff]
        %v348 = vld [vmem:[%s2 + $0x68] sm:$0xff]
        %v349 = vld [vmem:[%s2 + $0x70] sm:$0xff]
        %v350 = vld [vmem:[%s2 + $0x78] sm:$0xff]
        %v351 = vld [vmem:[%s2 + $0x80] sm:$0xff]
        %v352 = vld [vmem:[%s2 + $0x88] sm:$0xff]
        %v353 = vld [vmem:[%s2 + $0x90] sm:$0xff]
        %v354 = vld [vmem:[%s2 + $0x98] sm:$0xff]
        %v355 = vld [vmem:[%s2 + $0xa0] sm:$0xff]
        %v356 = vld [vmem:[%s2 + $0xa8] sm:$0xff]
        %v357 = vld [vmem:[%s2 + $0xb0] sm:$0xff]
        %v358 = vld [vmem:[%s2 + $0xb8] sm:$0xff]
        %v359 = vld [vmem:[%s2 + $0xc0] sm:$0xff]
        %v360 = vld [vmem:[%s2 + $0xc8] sm:$0xff]
        %v361 = vld [vmem:[%s2 + $0xd0] sm:$0xff]
        %v362 = vld [vmem:[%s2 + $0xd8] sm:$0xff]
        %v363 = vld [vmem:[%s2 + $0xe0] sm:$0xff]
        %v364 = vld [vmem:[%s2 + $0xe8] sm:$0xff]
        %v365 = vld [vmem:[%s2 + $0xf0] sm:$0xff]
        %v366 = vld [vmem:[%s2 + $0xf8] sm:$0xff]
        %367 = vmatprep.subr.mxu0 %v336
        %368 = vmatpush1.msra.mxu0 %v335
        %369 = vmatprep.subr.mxu0 %v338
        %370 = vmatpush1.msra.mxu0 %v337
        %371 = vmatprep.subr.mxu0 %v340
        %372 = vmatpush1.msra.mxu0 %v339
        %373 = vmatprep.subr.mxu0 %v342
        %374 = vmatpush1.msra.mxu0 %v341
        %375 = vmatprep.subr.mxu0 %v344
        %376 = vmatpush1.msra.mxu0 %v343
        %377 = vmatprep.subr.mxu0 %v346
        %378 = vmatpush1.msra.mxu0 %v345
        %379 = vmatprep.subr.mxu0 %v348
        %380 = vmatpush1.msra.mxu0 %v347
        %381 = vmatprep.subr.mxu0 %v350
        %382 = vmatpush1.msra.mxu0 %v349
        %383 = vmatprep.subr.mxu0 %v352
        %384 = vmatpush1.msra.mxu0 %v351
        %385 = vmatprep.subr.mxu0 %v354
        %386 = vmatpush1.msra.mxu0 %v353
        %387 = vmatprep.subr.mxu0 %v356
        %388 = vmatpush1.msra.mxu0 %v355
        %389 = vmatprep.subr.mxu0 %v358
        %390 = vmatpush1.msra.mxu0 %v357
        %391 = vmatprep.subr.mxu0 %v360
        %392 = vmatpush1.msra.mxu0 %v359
        %393 = vmatprep.subr.mxu0 %v362
        %394 = vmatpush1.msra.mxu0 %v361
        %395 = vmatprep.subr.mxu0 %v364
        %396 = vmatpush1.msra.mxu0 %v363
        %397 = vmatprep.subr.mxu0 %v366
        %398 = vmatpush1.msra.mxu0 %v365
        %399 = vmatprep.subr.mxu0 0.0
        %400 = vmatpush1.msra.mxu0 0.0
        %401 = vmatprep.subr.mxu0 0.0
        %402 = vmatpush1.msra.mxu0 0.0
        %403 = vmatprep.subr.mxu0 0.0
        %404 = vmatpush1.msra.mxu0 0.0
        %405 = vmatprep.subr.mxu0 0.0
        %406 = vmatpush1.msra.mxu0 0.0
        %407 = vmatprep.subr.mxu0 0.0
        %408 = vmatpush1.msra.mxu0 0.0
        %409 = vmatprep.subr.mxu0 0.0
        %410 = vmatpush1.msra.mxu0 0.0
        %411 = vmatprep.subr.mxu0 0.0
        %412 = vmatpush1.msra.mxu0 0.0
        %413 = vmatprep.subr.mxu0 0.0
        %414 = vmatpush1.msra.mxu0 0.0
        %415 = vmatprep.subr.mxu0 0.0
        %416 = vmatpush1.msra.mxu0 0.0
        %417 = vmatprep.subr.mxu0 0.0
        %418 = vmatpush1.msra.mxu0 0.0
        %419 = vmatprep.subr.mxu0 0.0
        %420 = vmatpush1.msra.mxu0 0.0
        %421 = vmatprep.subr.mxu0 0.0
        %422 = vmatpush1.msra.mxu0 0.0
        %423 = vmatprep.subr.mxu0 0.0
        %424 = vmatpush1.msra.mxu0 0.0
        %425 = vmatprep.subr.mxu0 0.0
        %426 = vmatpush1.msra.mxu0 0.0
        %427 = vmatprep.subr.mxu0 0.0
        %428 = vmatpush1.msra.mxu0 0.0
        %429 = vmatprep.subr.mxu0 0.0
        %430 = vmatpush1.msra.mxu0 0.0
        %431 = vmatprep.mubr.f32.mxu0 0.0
        %432 = vmatmul.mubr.f32.gmra.mrb[0].mxu0 %v334
        %v433 = vpop.f32.mrb[0].mxu0
        %v434 = vadd.f32 0.0, %v433
        %v435 = vpop.f32.mrb[0].mxu0
        %v436 = vadd.f32 0.0, %v435
        %437 = vdwg.mxu0
        %438 = vst [vmem:[%s246] sm:$0xff] %v434
        %439 = vst [vmem:[%s246 + $0x8] sm:$0xff] %v436
      $region40: #{vgae_forward.4} parent=31 // pred_fallthru
        _
      %p440 = scmp.lt.s32.totalorder %s19, 1
      %s441 = scalar_select %p440, %s19, 1
      %p442 = scmp.lt.s32.totalorder %s20, 0
      %s443 = scalar_select %p442, %s20, 0
      %s444 = smul.addr %s443, 2
      %s445 = smul.addr %s441, 2
      %s446 = sadd.s32 %s444, %s445
      %s447 = smul.addr %s446, 8
      %s448 = scalar_lea.vmem %s3, %s447
      // Predicated region
      $region41: #{vgae_forward.4} parent=31 // pred_check
        %p449 = pneg %p132
      $region42: #{vgae_forward.4} parent=31 // pred_check_branch
        %451 = sbr.rel (%p449) target = $region44
      $region43: #{vgae_forward.4} parent=31 // pred_region
        _
      $region44: #{vgae_forward.4} parent=31 // pred_fallthru
        _
    $region32: #{vgae_forward.4} parent=5 // pred_fallthru
      _
    %p452 = scmp.le.s32.totalorder 2, %s9
    // Predicated region
    $region45: #{vgae_forward.4} parent=5 // pred_check
      %p453 = pneg %p452
    $region46: #{vgae_forward.4} parent=5 // pred_check_branch
      %455 = sbr.rel (%p453) target = $region48
    $region47: #{vgae_forward.4} parent=5 // pred_region
      %s456 = ssub.s32 %s9, 2
      // Predicated region
      $region49: #{vgae_forward.4} parent=47 // pred_check
        %p457 = pneg %p138
      $region50: #{vgae_forward.4} parent=47 // pred_check_branch
        %459 = sbr.rel (%p457) target = $region52
      $region51: #{vgae_forward.4} parent=47 // pred_region
        %p460 = scmp.lt.s32.totalorder %s22, 1
        %s461 = scalar_select %p460, %s22, 1
        %p462 = scmp.lt.s32.totalorder %s23, 0
        %s463 = scalar_select %p462, %s23, 0
        %s464 = smul.addr %s463, 2
        %s465 = smul.addr %s461, 2
        %s466 = sadd.s32 %s464, %s465
        %s467 = smul.addr %s466, 8
        %s468 = scalar_lea.vmem %s3, %s467
      $region52: #{vgae_forward.4} parent=47 // pred_fallthru
        _
    $region48: #{vgae_forward.4} parent=5 // pred_fallthru
      _
  $region6: #{vgae_forward.4} parent=0 // loop_footer
    %s13 = sadd.s32 1, %s9
  $region7: #{vgae_forward.4} parent=0 // loop_footer_branch
    %8 = sbr.rel target = $region3
  $region8: #{vgae_forward.4} parent=0 // loop_exit
    _

</llo_original>
